<compile_context>
chip_gen: v5e
topology: v5e:2x2
jax: 0.10.0
libtpu: 0.0.40
codegen_flags: <defaults>
</compile_context>

<pallas_src>
import functools

import jax
import jax.numpy as jnp
import numpy as np
from jax.experimental import pallas as pl
from jax.experimental.pallas import tpu as pltpu


CIN, C1, C2, C3 = 3, 16, 32, 1     # Edge_Net channel sizes
CIN_PAD = 8                        # conv1 in-channels padded to f32 sublane granule
C3_PAD = 8                         # conv3 out-rows padded for MXU / f32 tiles


def _round_up(v, m):
    return (v + m - 1) // m * m


# Patch-matrix ("K") layout per layer: rows [k*C, (k+1)*C) hold tap k
# (k = ky*3 + kx) of the C input channels, row 9*C is constant ones (bias),
# remaining rows are zero padding up to the scratch dtype's sublane granule.
K1 = _round_up(9 * CIN_PAD + 1, 8)     # 80  : conv1 patch scratch is f32
K2 = _round_up(9 * C1 + 1, 16)         # 160 : conv2 patch scratch is bf16
K3 = _round_up(9 * C2 + 1, 16)         # 304 : conv3 patch scratch is bf16


def _conv3x3_dot(feat, p_ref, m_ref, w_ref, *, W):
    """3x3 'same' conv (+bias) on lane-dense activations via one MXU dot.

    feat  : (C, L) f32   previous layer's activations (L = images * H * W)
    p_ref : (Kp, L) VMEM patch scratch (f32 or bf16); taps as aligned slabs,
            row 9*C = ones (bias), remaining rows zero
    m_ref : (9, L) f32   per-tap {0,1} validity mask ('same' padding + seams)
    w_ref : (Cout_pad, Kp) bf16 weights, bias folded in as K column 9*C
    returns (Cout_pad, L) f32 pre-activation output.
    """
    C, L = feat.shape
    n_tail = p_ref.shape[0] - 9 * C

    # Bias/padding tail rows: first tail row = 1.0, rest = 0.  Small aligned
    # store, redone every step (see header re: parallel-axis scratch).
    rows = jax.lax.broadcasted_iota(jnp.int32, (n_tail, L), 0)
    p_ref[pl.ds(9 * C, n_tail), :] = (
        jnp.where(rows == 0, 1.0, 0.0).astype(p_ref.dtype))

    for k in range(9):                          # static unroll over the 9 taps
        oy, ox = k // 3 - 1, k % 3 - 1
        shift = oy * W + ox                     # flat lane shift of this tap
        if shift == 0:                          # centre tap: no roll, mask == 1
            tap = feat
        else:
            tap = pltpu.roll(feat, shift=(-shift) % L, axis=1)
            tap = tap * m_ref[pl.ds(k, 1), :]   # zero out-of-image / seam taps
        p_ref[pl.ds(k * C, C), :] = tap.astype(p_ref.dtype)

    return jnp.dot(w_ref[...], p_ref[...].astype(jnp.bfloat16),
                   preferred_element_type=jnp.float32)


def _edge_net_kernel(x_ref, w1_ref, w2_ref, w3_ref, m_ref, z_ref,
                     p1_ref, p2_ref, p3_ref, *, W):
    """One grid step of Edge_Net; all intermediates stay in VMEM."""
    x0 = x_ref[0]                                                       # (8, L)
    x1 = jnp.maximum(_conv3x3_dot(x0, p1_ref, m_ref, w1_ref, W=W), 0.0)  # (16, L)
    x2 = jnp.maximum(_conv3x3_dot(x1, p2_ref, m_ref, w2_ref, W=W), 0.0)  # (32, L)
    acc3 = _conv3x3_dot(x2, p3_ref, m_ref, w3_ref, W=W)                  # (8, L)
    z_ref[0] = acc3[0:C3, :]                                 # conv3 logits (1, L)


def _pack_conv_weights(w, b, cin_pad, k_pad, cout_pad):
    """(Cout,Cin,3,3)+(Cout,) -> (cout_pad, k_pad) bf16, bias at K col 9*cin_pad.

    K layout is tap-major (k = ky*3 + kx), in-channel minor, matching the
    in-kernel patch matrix.
    """
    co, ci = w.shape[0], w.shape[1]
    wt = jnp.transpose(w, (2, 3, 1, 0)).reshape(9, ci, co)       # (tap, ci, co)
    wt = jnp.pad(wt, ((0, 0), (0, cin_pad - ci), (0, 0)))
    wt = wt.reshape(9 * cin_pad, co).T                            # (co, 9*cin_pad)
    wt = jnp.concatenate([wt, b.reshape(co, 1)], axis=1)          # bias column
    wt = jnp.pad(wt, ((0, cout_pad - co), (0, k_pad - wt.shape[1])))
    return wt.astype(jnp.bfloat16)


def _boundary_mask(h, w, imgs):
    """(9, imgs*h*w) f32 {0,1}: tap k valid at (y, x)?  Tiled per image."""
    yy, xx = np.meshgrid(np.arange(h), np.arange(w), indexing="ij")
    rows = [((yy + oy >= 0) & (yy + oy < h) &
             (xx + ox >= 0) & (xx + ox < w)).reshape(h * w)
            for oy in (-1, 0, 1) for ox in (-1, 0, 1)]
    m = np.stack(rows).astype(np.float32)
    return jnp.asarray(np.tile(m, (1, imgs)))


@functools.partial(jax.jit, static_argnames=("images_per_step",))
def _edge_net_pallas(x_nchw, params, images_per_step=1):
    """Fused Edge_Net forward.  Returns (softmax output, conv3 logits)."""
    n, cin, h, w = x_nchw.shape
    hw = h * w
    g = images_per_step
    if n % g != 0:
        g = 1
    steps = n // g
    L = g * hw                                  # lane width per grid step

    w1t = _pack_conv_weights(params["w1"], params["b1"], CIN_PAD, K1, C1)
    w2t = _pack_conv_weights(params["w2"], params["b2"], C1, K2, C2)
    w3t = _pack_conv_weights(params["w3"], params["b3"], C2, K3, C3_PAD)

    # (steps, CIN_PAD, L): g images concatenated along lanes, channels padded
    # 3 -> 8 so the in-kernel tap-slab stores stay sublane aligned.
    xg = (x_nchw.reshape(steps, g, cin, hw).transpose(0, 2, 1, 3)
          .reshape(steps, cin, L))
    xg = jnp.pad(xg, ((0, 0), (0, CIN_PAD - cin), (0, 0)))

    mask = _boundary_mask(h, w, g)

    full2d = lambda i: (0, 0)
    z = pl.pallas_call(
        functools.partial(_edge_net_kernel, W=w),
        out_shape=jax.ShapeDtypeStruct((steps, C3, L), jnp.float32),
        grid=(steps,),
        in_specs=[
            pl.BlockSpec((1, CIN_PAD, L), lambda i: (i, 0, 0)),
            pl.BlockSpec(w1t.shape, full2d),
            pl.BlockSpec(w2t.shape, full2d),
            pl.BlockSpec(w3t.shape, full2d),
            pl.BlockSpec(mask.shape, full2d),
        ],
        out_specs=pl.BlockSpec((1, C3, L), lambda i: (i, 0, 0)),
        scratch_shapes=[
            pltpu.VMEM((K1, L), jnp.float32),    # conv1 patch (taps + bias row)
            pltpu.VMEM((K2, L), jnp.bfloat16),   # conv2 patch
            pltpu.VMEM((K3, L), jnp.bfloat16),   # conv3 patch
        ],
        compiler_params=pltpu.CompilerParams(
            dimension_semantics=("parallel",)),
    )(xg, w1t, w2t, w3t, mask)

    logits = (z.reshape(steps, C3, g, hw).transpose(0, 2, 1, 3)
              .reshape(n, C3, h, w))
    # PyTorch Softmax(dim=1): single conv3 channel -> constant 1.0.  Applied in
    # the wrapper so the kernel only emits one (lane-dense) output stream.
    return jax.nn.softmax(logits, axis=1), logits


def _default_images_per_step(n):
    """Lane-batch the whole batch on single-TC chips (v5e/v6e); keep a
    'parallel' grid axis (one image per TensorCore) otherwise (v7x etc.)."""
    try:
        kind = jax.devices()[0].device_kind.lower()
    except Exception:
        return 1
    if any(t in kind for t in ("v5e", "v5 lite", "v5lite", "v6e", "v6 lite",
                               "trillium")):
        return n
    return 1


def edge_net_forward(x_nchw, params, images_per_step=None):
    """Edge_Net.forward: (N, 3, H, W) -> (N, 1, H, W)."""
    if images_per_step is None:
        images_per_step = _default_images_per_step(x_nchw.shape[0])
    return _edge_net_pallas(x_nchw, params, images_per_step=images_per_step)[0]


def init_edge_net_params(key):
    """Deterministic synthetic params in PyTorch layout: (Cout, Cin, 3, 3)."""
    ks = jax.random.split(key, 6)

    def wconv(k, cout, cin):
        return jax.random.normal(k, (cout, cin, 3, 3), jnp.float32) * 0.1

    def bias(k, cout):
        return jax.random.normal(k, (cout,), jnp.float32) * 0.01

    return {"w1": wconv(ks[0], C1, CIN), "b1": bias(ks[1], C1),
            "w2": wconv(ks[2], C2, C1),  "b2": bias(ks[3], C2),
            "w3": wconv(ks[4], C3, C2),  "b3": bias(ks[5], C3)}


def _ref_forward(x, params):
    """Pure-JAX reference of Edge_Net.forward (softmax output and logits)."""
    def conv(v, wk, bk):
        y = jax.lax.conv_general_dilated(
            v, wk, window_strides=(1, 1), padding="SAME",
            dimension_numbers=("NCHW", "OIHW", "NCHW"),
            precision=jax.lax.Precision.HIGHEST)
        return y + bk.reshape(1, -1, 1, 1)

    x1 = jax.nn.relu(conv(x, params["w1"], params["b1"]))
    x2 = jax.nn.relu(conv(x1, params["w2"], params["b2"]))
    logits = conv(x2, params["w3"], params["b3"])
    return jax.nn.softmax(logits, axis=1), logits


if __name__ == "__main__":
    key = jax.random.PRNGKey(0)
    k_x, k_p = jax.random.split(key)

    # Small shapes consistent with the module: batch=2, 3 input channels, 16x16.
    x = jax.random.normal(k_x, (2, 3, 16, 16), jnp.float32)
    params = init_edge_net_params(k_p)

    ref_y, ref_logits = _ref_forward(x, params)

    # Exercise both batching strategies: one image per 'parallel' grid step
    # (v7x: one per TensorCore) and the whole batch folded into the lane axis
    # (single grid step; best on single-TC v5e/v6e).
    for g in (1, x.shape[0]):
        y, logits = jax.block_until_ready(
            _edge_net_pallas(x, params, images_per_step=g))
        assert y.shape == (2, 1, 16, 16), y.shape
        # Softmax over the single conv3 channel must be exactly 1 everywhere.
        assert bool(jnp.allclose(y, 1.0)), "softmax(dim=1) over one channel failed"
        # Validate the fused conv path (pre-softmax logits) against the
        # pure-JAX reference; bf16 MXU operands -> loose tolerance.
        max_err = float(jnp.max(jnp.abs(logits - ref_logits)))
        assert bool(jnp.allclose(logits, ref_logits, atol=5e-2, rtol=5e-2)), max_err
        assert bool(jnp.allclose(y, ref_y, atol=1e-5))

    # Default (auto-selected per chip generation) user-facing path.
    y = jax.block_until_ready(edge_net_forward(x, params))
    assert y.shape == (2, 1, 16, 16), y.shape
    print("KERNEL_OK")
</pallas_src>

<mosaic_0001>
module attributes {stable_mosaic.version = 11 : i64} {
  func.func @_edge_net_kernel(%arg0: i32, %arg1: memref<1x8x256xf32, #tpu.memory_space<vmem>>, %arg2: memref<16x80xbf16, #tpu.memory_space<vmem>>, %arg3: memref<32x160xbf16, #tpu.memory_space<vmem>>, %arg4: memref<8x304xbf16, #tpu.memory_space<vmem>>, %arg5: memref<9x256xf32, #tpu.memory_space<vmem>>, %arg6: memref<1x1x256xf32, #tpu.memory_space<vmem>>, %arg7: memref<80x256xf32, #tpu.memory_space<vmem>>, %arg8: memref<160x256xbf16, #tpu.memory_space<vmem>>, %arg9: memref<304x256xbf16, #tpu.memory_space<vmem>>) attributes {dimension_semantics = [#tpu.dimension_semantics<parallel>], iteration_bounds = array<i64: 2>, scalar_prefetch = 0 : i64, scratch_operands = 3 : i64, tpu.core_type = #tpu.core_type<tc>, window_params = [{transform_indices = @transform_0, window_bounds = array<i64: 1, 8, 256>}, {pipeline_mode = #tpu.pipeline_mode<synchronous>, transform_indices = @transform_1, window_bounds = array<i64: 16, 80>}, {pipeline_mode = #tpu.pipeline_mode<synchronous>, transform_indices = @transform_2, window_bounds = array<i64: 32, 160>}, {pipeline_mode = #tpu.pipeline_mode<synchronous>, transform_indices = @transform_3, window_bounds = array<i64: 8, 304>}, {pipeline_mode = #tpu.pipeline_mode<synchronous>, transform_indices = @transform_4, window_bounds = array<i64: 9, 256>}, {transform_indices = @transform_5, window_bounds = array<i64: 1, 1, 256>}]} {
    %c0 = arith.constant 0 : index
    %c0_0 = arith.constant 0 : index
    %c0_1 = arith.constant 0 : index
    %0 = vector.load %arg1[%c0, %c0_0, %c0_1] : memref<1x8x256xf32, #tpu.memory_space<vmem>>, vector<1x8x256xf32>
    %1 = vector.shape_cast %0 : vector<1x8x256xf32> to vector<8x256xf32>
    %2 = tpu.iota {dimensions = array<i32: 0>} : vector<8x256xi32>
    %c0_i32 = arith.constant 0 : i32
    %3 = vector.broadcast %c0_i32 : i32 to vector<8x256xi32>
    %4 = arith.cmpi eq, %2, %3 : vector<8x256xi32>
    %cst = arith.constant 1.000000e+00 : f32
    %cst_2 = arith.constant 0.000000e+00 : f32
    %5 = vector.broadcast %cst : f32 to vector<8x256xf32>
    %6 = vector.broadcast %cst_2 : f32 to vector<8x256xf32>
    %7 = arith.select %4, %5, %6 : vector<8x256xi1>, vector<8x256xf32>
    %c72 = arith.constant 72 : index
    %c0_3 = arith.constant 0 : index
    %8 = vector.load %arg7[%c72, %c0_3] : memref<80x256xf32, #tpu.memory_space<vmem>>, vector<8x256xf32>
    tpu.vector_store %arg7[%c72, %c0_3], %7 {strides = array<i32>} : memref<80x256xf32, #tpu.memory_space<vmem>>, vector<8x256xf32>,
    %c17_i32 = arith.constant 17 : i32
    %9 = tpu.dynamic_rotate %1 by %c17_i32 dim 1 : vector<8x256xf32>, i32 -> vector<8x256xf32>
    %c0_4 = arith.constant 0 : index
    %c0_5 = arith.constant 0 : index
    %10 = vector.load %arg5[%c0_4, %c0_5] : memref<9x256xf32, #tpu.memory_space<vmem>>, vector<1x256xf32>
    %11 = vector.broadcast %10 : vector<1x256xf32> to vector<8x256xf32>
    %12 = arith.mulf %9, %11 : vector<8x256xf32>
    %c0_6 = arith.constant 0 : index
    %c0_7 = arith.constant 0 : index
    %13 = vector.load %arg7[%c0_6, %c0_7] : memref<80x256xf32, #tpu.memory_space<vmem>>, vector<8x256xf32>
    tpu.vector_store %arg7[%c0_6, %c0_7], %12 {strides = array<i32>} : memref<80x256xf32, #tpu.memory_space<vmem>>, vector<8x256xf32>,
    %c16_i32 = arith.constant 16 : i32
    %14 = tpu.dynamic_rotate %1 by %c16_i32 dim 1 : vector<8x256xf32>, i32 -> vector<8x256xf32>
    %c1 = arith.constant 1 : index
    %c0_8 = arith.constant 0 : index
    %15 = vector.load %arg5[%c1, %c0_8] : memref<9x256xf32, #tpu.memory_space<vmem>>, vector<1x256xf32>
    %16 = vector.broadcast %15 : vector<1x256xf32> to vector<8x256xf32>
    %17 = arith.mulf %14, %16 : vector<8x256xf32>
    %c8 = arith.constant 8 : index
    %c0_9 = arith.constant 0 : index
    %18 = vector.load %arg7[%c8, %c0_9] : memref<80x256xf32, #tpu.memory_space<vmem>>, vector<8x256xf32>
    tpu.vector_store %arg7[%c8, %c0_9], %17 {strides = array<i32>} : memref<80x256xf32, #tpu.memory_space<vmem>>, vector<8x256xf32>,
    %c15_i32 = arith.constant 15 : i32
    %19 = tpu.dynamic_rotate %1 by %c15_i32 dim 1 : vector<8x256xf32>, i32 -> vector<8x256xf32>
    %c2 = arith.constant 2 : index
    %c0_10 = arith.constant 0 : index
    %20 = vector.load %arg5[%c2, %c0_10] : memref<9x256xf32, #tpu.memory_space<vmem>>, vector<1x256xf32>
    %21 = vector.broadcast %20 : vector<1x256xf32> to vector<8x256xf32>
    %22 = arith.mulf %19, %21 : vector<8x256xf32>
    %c16 = arith.constant 16 : index
    %c0_11 = arith.constant 0 : index
    %23 = vector.load %arg7[%c16, %c0_11] : memref<80x256xf32, #tpu.memory_space<vmem>>, vector<8x256xf32>
    tpu.vector_store %arg7[%c16, %c0_11], %22 {strides = array<i32>} : memref<80x256xf32, #tpu.memory_space<vmem>>, vector<8x256xf32>,
    %c1_i32 = arith.constant 1 : i32
    %24 = tpu.dynamic_rotate %1 by %c1_i32 dim 1 : vector<8x256xf32>, i32 -> vector<8x256xf32>
    %c3 = arith.constant 3 : index
    %c0_12 = arith.constant 0 : index
    %25 = vector.load %arg5[%c3, %c0_12] : memref<9x256xf32, #tpu.memory_space<vmem>>, vector<1x256xf32>
    %26 = vector.broadcast %25 : vector<1x256xf32> to vector<8x256xf32>
    %27 = arith.mulf %24, %26 : vector<8x256xf32>
    %c24 = arith.constant 24 : index
    %c0_13 = arith.constant 0 : index
    %28 = vector.load %arg7[%c24, %c0_13] : memref<80x256xf32, #tpu.memory_space<vmem>>, vector<8x256xf32>
    tpu.vector_store %arg7[%c24, %c0_13], %27 {strides = array<i32>} : memref<80x256xf32, #tpu.memory_space<vmem>>, vector<8x256xf32>,
    %c32 = arith.constant 32 : index
    %c0_14 = arith.constant 0 : index
    %29 = vector.load %arg7[%c32, %c0_14] : memref<80x256xf32, #tpu.memory_space<vmem>>, vector<8x256xf32>
    tpu.vector_store %arg7[%c32, %c0_14], %1 {strides = array<i32>} : memref<80x256xf32, #tpu.memory_space<vmem>>, vector<8x256xf32>,
    %c255_i32 = arith.constant 255 : i32
    %30 = tpu.dynamic_rotate %1 by %c255_i32 dim 1 : vector<8x256xf32>, i32 -> vector<8x256xf32>
    %c5 = arith.constant 5 : index
    %c0_15 = arith.constant 0 : index
    %31 = vector.load %arg5[%c5, %c0_15] : memref<9x256xf32, #tpu.memory_space<vmem>>, vector<1x256xf32>
    %32 = vector.broadcast %31 : vector<1x256xf32> to vector<8x256xf32>
    %33 = arith.mulf %30, %32 : vector<8x256xf32>
    %c40 = arith.constant 40 : index
    %c0_16 = arith.constant 0 : index
    %34 = vector.load %arg7[%c40, %c0_16] : memref<80x256xf32, #tpu.memory_space<vmem>>, vector<8x256xf32>
    tpu.vector_store %arg7[%c40, %c0_16], %33 {strides = array<i32>} : memref<80x256xf32, #tpu.memory_space<vmem>>, vector<8x256xf32>,
    %c241_i32 = arith.constant 241 : i32
    %35 = tpu.dynamic_rotate %1 by %c241_i32 dim 1 : vector<8x256xf32>, i32 -> vector<8x256xf32>
    %c6 = arith.constant 6 : index
    %c0_17 = arith.constant 0 : index
    %36 = vector.load %arg5[%c6, %c0_17] : memref<9x256xf32, #tpu.memory_space<vmem>>, vector<1x256xf32>
    %37 = vector.broadcast %36 : vector<1x256xf32> to vector<8x256xf32>
    %38 = arith.mulf %35, %37 : vector<8x256xf32>
    %c48 = arith.constant 48 : index
    %c0_18 = arith.constant 0 : index
    %39 = vector.load %arg7[%c48, %c0_18] : memref<80x256xf32, #tpu.memory_space<vmem>>, vector<8x256xf32>
    tpu.vector_store %arg7[%c48, %c0_18], %38 {strides = array<i32>} : memref<80x256xf32, #tpu.memory_space<vmem>>, vector<8x256xf32>,
    %c240_i32 = arith.constant 240 : i32
    %40 = tpu.dynamic_rotate %1 by %c240_i32 dim 1 : vector<8x256xf32>, i32 -> vector<8x256xf32>
    %c7 = arith.constant 7 : index
    %c0_19 = arith.constant 0 : index
    %41 = vector.load %arg5[%c7, %c0_19] : memref<9x256xf32, #tpu.memory_space<vmem>>, vector<1x256xf32>
    %42 = vector.broadcast %41 : vector<1x256xf32> to vector<8x256xf32>
    %43 = arith.mulf %40, %42 : vector<8x256xf32>
    %c56 = arith.constant 56 : index
    %c0_20 = arith.constant 0 : index
    %44 = vector.load %arg7[%c56, %c0_20] : memref<80x256xf32, #tpu.memory_space<vmem>>, vector<8x256xf32>
    tpu.vector_store %arg7[%c56, %c0_20], %43 {strides = array<i32>} : memref<80x256xf32, #tpu.memory_space<vmem>>, vector<8x256xf32>,
    %c239_i32 = arith.constant 239 : i32
    %45 = tpu.dynamic_rotate %1 by %c239_i32 dim 1 : vector<8x256xf32>, i32 -> vector<8x256xf32>
    %c8_21 = arith.constant 8 : index
    %c0_22 = arith.constant 0 : index
    %46 = vector.load %arg5[%c8_21, %c0_22] : memref<9x256xf32, #tpu.memory_space<vmem>>, vector<1x256xf32>
    %47 = vector.broadcast %46 : vector<1x256xf32> to vector<8x256xf32>
    %48 = arith.mulf %45, %47 : vector<8x256xf32>
    %c64 = arith.constant 64 : index
    %c0_23 = arith.constant 0 : index
    %49 = vector.load %arg7[%c64, %c0_23] : memref<80x256xf32, #tpu.memory_space<vmem>>, vector<8x256xf32>
    tpu.vector_store %arg7[%c64, %c0_23], %48 {strides = array<i32>} : memref<80x256xf32, #tpu.memory_space<vmem>>, vector<8x256xf32>,
    %c0_24 = arith.constant 0 : index
    %c0_25 = arith.constant 0 : index
    %50 = vector.load %arg2[%c0_24, %c0_25] : memref<16x80xbf16, #tpu.memory_space<vmem>>, vector<16x80xbf16>
    %c0_26 = arith.constant 0 : index
    %c0_27 = arith.constant 0 : index
    %51 = vector.load %arg7[%c0_26, %c0_27] : memref<80x256xf32, #tpu.memory_space<vmem>>, vector<80x256xf32>
    %52 = arith.truncf %51 : vector<80x256xf32> to vector<80x256xbf16>
    %cst_28 = arith.constant dense<0.000000e+00> : vector<16x256xf32>
    %53 = tpu.matmul %50, %52, %cst_28 {dimension_numbers = #tpu.dot_dimension_numbers<[1], [0], [0], [1], [0, 0, 1, 1], [], []>} : vector<16x80xbf16>, vector<80x256xbf16>, vector<16x256xf32> -> vector<16x256xf32>
    %cst_29 = arith.constant 0.000000e+00 : f32
    %54 = vector.broadcast %cst_29 : f32 to vector<16x256xf32>
    %55 = arith.maximumf %53, %54 : vector<16x256xf32>
    %56 = tpu.iota {dimensions = array<i32: 0>} : vector<16x256xi32>
    %c0_i32_30 = arith.constant 0 : i32
    %57 = vector.broadcast %c0_i32_30 : i32 to vector<16x256xi32>
    %58 = arith.cmpi eq, %56, %57 : vector<16x256xi32>
    %cst_31 = arith.constant 1.000000e+00 : f32
    %cst_32 = arith.constant 0.000000e+00 : f32
    %59 = vector.broadcast %cst_31 : f32 to vector<16x256xf32>
    %60 = vector.broadcast %cst_32 : f32 to vector<16x256xf32>
    %61 = arith.select %58, %59, %60 : vector<16x256xi1>, vector<16x256xf32>
    %62 = arith.truncf %61 : vector<16x256xf32> to vector<16x256xbf16>
    %c144 = arith.constant 144 : index
    %c0_33 = arith.constant 0 : index
    %63 = vector.load %arg8[%c144, %c0_33] : memref<160x256xbf16, #tpu.memory_space<vmem>>, vector<16x256xbf16>
    tpu.vector_store %arg8[%c144, %c0_33], %62 {strides = array<i32>} : memref<160x256xbf16, #tpu.memory_space<vmem>>, vector<16x256xbf16>,
    %c17_i32_34 = arith.constant 17 : i32
    %64 = tpu.dynamic_rotate %55 by %c17_i32_34 dim 1 : vector<16x256xf32>, i32 -> vector<16x256xf32>
    %c0_35 = arith.constant 0 : index
    %c0_36 = arith.constant 0 : index
    %65 = vector.load %arg5[%c0_35, %c0_36] : memref<9x256xf32, #tpu.memory_space<vmem>>, vector<1x256xf32>
    %66 = vector.broadcast %65 : vector<1x256xf32> to vector<16x256xf32>
    %67 = arith.mulf %64, %66 : vector<16x256xf32>
    %68 = arith.truncf %67 : vector<16x256xf32> to vector<16x256xbf16>
    %c0_37 = arith.constant 0 : index
    %c0_38 = arith.constant 0 : index
    %69 = vector.load %arg8[%c0_37, %c0_38] : memref<160x256xbf16, #tpu.memory_space<vmem>>, vector<16x256xbf16>
    tpu.vector_store %arg8[%c0_37, %c0_38], %68 {strides = array<i32>} : memref<160x256xbf16, #tpu.memory_space<vmem>>, vector<16x256xbf16>,
    %c16_i32_39 = arith.constant 16 : i32
    %70 = tpu.dynamic_rotate %55 by %c16_i32_39 dim 1 : vector<16x256xf32>, i32 -> vector<16x256xf32>
    %c1_40 = arith.constant 1 : index
    %c0_41 = arith.constant 0 : index
    %71 = vector.load %arg5[%c1_40, %c0_41] : memref<9x256xf32, #tpu.memory_space<vmem>>, vector<1x256xf32>
    %72 = vector.broadcast %71 : vector<1x256xf32> to vector<16x256xf32>
    %73 = arith.mulf %70, %72 : vector<16x256xf32>
    %74 = arith.truncf %73 : vector<16x256xf32> to vector<16x256xbf16>
    %c16_42 = arith.constant 16 : index
    %c0_43 = arith.constant 0 : index
    %75 = vector.load %arg8[%c16_42, %c0_43] : memref<160x256xbf16, #tpu.memory_space<vmem>>, vector<16x256xbf16>
    tpu.vector_store %arg8[%c16_42, %c0_43], %74 {strides = array<i32>} : memref<160x256xbf16, #tpu.memory_space<vmem>>, vector<16x256xbf16>,
    %c15_i32_44 = arith.constant 15 : i32
    %76 = tpu.dynamic_rotate %55 by %c15_i32_44 dim 1 : vector<16x256xf32>, i32 -> vector<16x256xf32>
    %c2_45 = arith.constant 2 : index
    %c0_46 = arith.constant 0 : index
    %77 = vector.load %arg5[%c2_45, %c0_46] : memref<9x256xf32, #tpu.memory_space<vmem>>, vector<1x256xf32>
    %78 = vector.broadcast %77 : vector<1x256xf32> to vector<16x256xf32>
    %79 = arith.mulf %76, %78 : vector<16x256xf32>
    %80 = arith.truncf %79 : vector<16x256xf32> to vector<16x256xbf16>
    %c32_47 = arith.constant 32 : index
    %c0_48 = arith.constant 0 : index
    %81 = vector.load %arg8[%c32_47, %c0_48] : memref<160x256xbf16, #tpu.memory_space<vmem>>, vector<16x256xbf16>
    tpu.vector_store %arg8[%c32_47, %c0_48], %80 {strides = array<i32>} : memref<160x256xbf16, #tpu.memory_space<vmem>>, vector<16x256xbf16>,
    %c1_i32_49 = arith.constant 1 : i32
    %82 = tpu.dynamic_rotate %55 by %c1_i32_49 dim 1 : vector<16x256xf32>, i32 -> vector<16x256xf32>
    %c3_50 = arith.constant 3 : index
    %c0_51 = arith.constant 0 : index
    %83 = vector.load %arg5[%c3_50, %c0_51] : memref<9x256xf32, #tpu.memory_space<vmem>>, vector<1x256xf32>
    %84 = vector.broadcast %83 : vector<1x256xf32> to vector<16x256xf32>
    %85 = arith.mulf %82, %84 : vector<16x256xf32>
    %86 = arith.truncf %85 : vector<16x256xf32> to vector<16x256xbf16>
    %c48_52 = arith.constant 48 : index
    %c0_53 = arith.constant 0 : index
    %87 = vector.load %arg8[%c48_52, %c0_53] : memref<160x256xbf16, #tpu.memory_space<vmem>>, vector<16x256xbf16>
    tpu.vector_store %arg8[%c48_52, %c0_53], %86 {strides = array<i32>} : memref<160x256xbf16, #tpu.memory_space<vmem>>, vector<16x256xbf16>,
    %88 = arith.truncf %55 : vector<16x256xf32> to vector<16x256xbf16>
    %c64_54 = arith.constant 64 : index
    %c0_55 = arith.constant 0 : index
    %89 = vector.load %arg8[%c64_54, %c0_55] : memref<160x256xbf16, #tpu.memory_space<vmem>>, vector<16x256xbf16>
    tpu.vector_store %arg8[%c64_54, %c0_55], %88 {strides = array<i32>} : memref<160x256xbf16, #tpu.memory_space<vmem>>, vector<16x256xbf16>,
    %c255_i32_56 = arith.constant 255 : i32
    %90 = tpu.dynamic_rotate %55 by %c255_i32_56 dim 1 : vector<16x256xf32>, i32 -> vector<16x256xf32>
    %c5_57 = arith.constant 5 : index
    %c0_58 = arith.constant 0 : index
    %91 = vector.load %arg5[%c5_57, %c0_58] : memref<9x256xf32, #tpu.memory_space<vmem>>, vector<1x256xf32>
    %92 = vector.broadcast %91 : vector<1x256xf32> to vector<16x256xf32>
    %93 = arith.mulf %90, %92 : vector<16x256xf32>
    %94 = arith.truncf %93 : vector<16x256xf32> to vector<16x256xbf16>
    %c80 = arith.constant 80 : index
    %c0_59 = arith.constant 0 : index
    %95 = vector.load %arg8[%c80, %c0_59] : memref<160x256xbf16, #tpu.memory_space<vmem>>, vector<16x256xbf16>
    tpu.vector_store %arg8[%c80, %c0_59], %94 {strides = array<i32>} : memref<160x256xbf16, #tpu.memory_space<vmem>>, vector<16x256xbf16>,
    %c241_i32_60 = arith.constant 241 : i32
    %96 = tpu.dynamic_rotate %55 by %c241_i32_60 dim 1 : vector<16x256xf32>, i32 -> vector<16x256xf32>
    %c6_61 = arith.constant 6 : index
    %c0_62 = arith.constant 0 : index
    %97 = vector.load %arg5[%c6_61, %c0_62] : memref<9x256xf32, #tpu.memory_space<vmem>>, vector<1x256xf32>
    %98 = vector.broadcast %97 : vector<1x256xf32> to vector<16x256xf32>
    %99 = arith.mulf %96, %98 : vector<16x256xf32>
    %100 = arith.truncf %99 : vector<16x256xf32> to vector<16x256xbf16>
    %c96 = arith.constant 96 : index
    %c0_63 = arith.constant 0 : index
    %101 = vector.load %arg8[%c96, %c0_63] : memref<160x256xbf16, #tpu.memory_space<vmem>>, vector<16x256xbf16>
    tpu.vector_store %arg8[%c96, %c0_63], %100 {strides = array<i32>} : memref<160x256xbf16, #tpu.memory_space<vmem>>, vector<16x256xbf16>,
    %c240_i32_64 = arith.constant 240 : i32
    %102 = tpu.dynamic_rotate %55 by %c240_i32_64 dim 1 : vector<16x256xf32>, i32 -> vector<16x256xf32>
    %c7_65 = arith.constant 7 : index
    %c0_66 = arith.constant 0 : index
    %103 = vector.load %arg5[%c7_65, %c0_66] : memref<9x256xf32, #tpu.memory_space<vmem>>, vector<1x256xf32>
    %104 = vector.broadcast %103 : vector<1x256xf32> to vector<16x256xf32>
    %105 = arith.mulf %102, %104 : vector<16x256xf32>
    %106 = arith.truncf %105 : vector<16x256xf32> to vector<16x256xbf16>
    %c112 = arith.constant 112 : index
    %c0_67 = arith.constant 0 : index
    %107 = vector.load %arg8[%c112, %c0_67] : memref<160x256xbf16, #tpu.memory_space<vmem>>, vector<16x256xbf16>
    tpu.vector_store %arg8[%c112, %c0_67], %106 {strides = array<i32>} : memref<160x256xbf16, #tpu.memory_space<vmem>>, vector<16x256xbf16>,
    %c239_i32_68 = arith.constant 239 : i32
    %108 = tpu.dynamic_rotate %55 by %c239_i32_68 dim 1 : vector<16x256xf32>, i32 -> vector<16x256xf32>
    %c8_69 = arith.constant 8 : index
    %c0_70 = arith.constant 0 : index
    %109 = vector.load %arg5[%c8_69, %c0_70] : memref<9x256xf32, #tpu.memory_space<vmem>>, vector<1x256xf32>
    %110 = vector.broadcast %109 : vector<1x256xf32> to vector<16x256xf32>
    %111 = arith.mulf %108, %110 : vector<16x256xf32>
    %112 = arith.truncf %111 : vector<16x256xf32> to vector<16x256xbf16>
    %c128 = arith.constant 128 : index
    %c0_71 = arith.constant 0 : index
    %113 = vector.load %arg8[%c128, %c0_71] : memref<160x256xbf16, #tpu.memory_space<vmem>>, vector<16x256xbf16>
    tpu.vector_store %arg8[%c128, %c0_71], %112 {strides = array<i32>} : memref<160x256xbf16, #tpu.memory_space<vmem>>, vector<16x256xbf16>,
    %c0_72 = arith.constant 0 : index
    %c0_73 = arith.constant 0 : index
    %114 = vector.load %arg3[%c0_72, %c0_73] : memref<32x160xbf16, #tpu.memory_space<vmem>>, vector<32x160xbf16>
    %c0_74 = arith.constant 0 : index
    %c0_75 = arith.constant 0 : index
    %115 = vector.load %arg8[%c0_74, %c0_75] : memref<160x256xbf16, #tpu.memory_space<vmem>>, vector<160x256xbf16>
    %cst_76 = arith.constant dense<0.000000e+00> : vector<32x256xf32>
    %116 = tpu.matmul %114, %115, %cst_76 {dimension_numbers = #tpu.dot_dimension_numbers<[1], [0], [0], [1], [0, 0, 1, 1], [], []>} : vector<32x160xbf16>, vector<160x256xbf16>, vector<32x256xf32> -> vector<32x256xf32>
    %cst_77 = arith.constant 0.000000e+00 : f32
    %117 = vector.broadcast %cst_77 : f32 to vector<32x256xf32>
    %118 = arith.maximumf %116, %117 : vector<32x256xf32>
    %119 = tpu.iota {dimensions = array<i32: 0>} : vector<16x256xi32>
    %c0_i32_78 = arith.constant 0 : i32
    %120 = vector.broadcast %c0_i32_78 : i32 to vector<16x256xi32>
    %121 = arith.cmpi eq, %119, %120 : vector<16x256xi32>
    %cst_79 = arith.constant 1.000000e+00 : f32
    %cst_80 = arith.constant 0.000000e+00 : f32
    %122 = vector.broadcast %cst_79 : f32 to vector<16x256xf32>
    %123 = vector.broadcast %cst_80 : f32 to vector<16x256xf32>
    %124 = arith.select %121, %122, %123 : vector<16x256xi1>, vector<16x256xf32>
    %125 = arith.truncf %124 : vector<16x256xf32> to vector<16x256xbf16>
    %c288 = arith.constant 288 : index
    %c0_81 = arith.constant 0 : index
    %126 = vector.load %arg9[%c288, %c0_81] : memref<304x256xbf16, #tpu.memory_space<vmem>>, vector<16x256xbf16>
    tpu.vector_store %arg9[%c288, %c0_81], %125 {strides = array<i32>} : memref<304x256xbf16, #tpu.memory_space<vmem>>, vector<16x256xbf16>,
    %c17_i32_82 = arith.constant 17 : i32
    %127 = tpu.dynamic_rotate %118 by %c17_i32_82 dim 1 : vector<32x256xf32>, i32 -> vector<32x256xf32>
    %c0_83 = arith.constant 0 : index
    %c0_84 = arith.constant 0 : index
    %128 = vector.load %arg5[%c0_83, %c0_84] : memref<9x256xf32, #tpu.memory_space<vmem>>, vector<1x256xf32>
    %129 = vector.broadcast %128 : vector<1x256xf32> to vector<32x256xf32>
    %130 = arith.mulf %127, %129 : vector<32x256xf32>
    %131 = arith.truncf %130 : vector<32x256xf32> to vector<32x256xbf16>
    %c0_85 = arith.constant 0 : index
    %c0_86 = arith.constant 0 : index
    %132 = vector.load %arg9[%c0_85, %c0_86] : memref<304x256xbf16, #tpu.memory_space<vmem>>, vector<32x256xbf16>
    tpu.vector_store %arg9[%c0_85, %c0_86], %131 {strides = array<i32>} : memref<304x256xbf16, #tpu.memory_space<vmem>>, vector<32x256xbf16>,
    %c16_i32_87 = arith.constant 16 : i32
    %133 = tpu.dynamic_rotate %118 by %c16_i32_87 dim 1 : vector<32x256xf32>, i32 -> vector<32x256xf32>
    %c1_88 = arith.constant 1 : index
    %c0_89 = arith.constant 0 : index
    %134 = vector.load %arg5[%c1_88, %c0_89] : memref<9x256xf32, #tpu.memory_space<vmem>>, vector<1x256xf32>
    %135 = vector.broadcast %134 : vector<1x256xf32> to vector<32x256xf32>
    %136 = arith.mulf %133, %135 : vector<32x256xf32>
    %137 = arith.truncf %136 : vector<32x256xf32> to vector<32x256xbf16>
    %c32_90 = arith.constant 32 : index
    %c0_91 = arith.constant 0 : index
    %138 = vector.load %arg9[%c32_90, %c0_91] : memref<304x256xbf16, #tpu.memory_space<vmem>>, vector<32x256xbf16>
    tpu.vector_store %arg9[%c32_90, %c0_91], %137 {strides = array<i32>} : memref<304x256xbf16, #tpu.memory_space<vmem>>, vector<32x256xbf16>,
    %c15_i32_92 = arith.constant 15 : i32
    %139 = tpu.dynamic_rotate %118 by %c15_i32_92 dim 1 : vector<32x256xf32>, i32 -> vector<32x256xf32>
    %c2_93 = arith.constant 2 : index
    %c0_94 = arith.constant 0 : index
    %140 = vector.load %arg5[%c2_93, %c0_94] : memref<9x256xf32, #tpu.memory_space<vmem>>, vector<1x256xf32>
    %141 = vector.broadcast %140 : vector<1x256xf32> to vector<32x256xf32>
    %142 = arith.mulf %139, %141 : vector<32x256xf32>
    %143 = arith.truncf %142 : vector<32x256xf32> to vector<32x256xbf16>
    %c64_95 = arith.constant 64 : index
    %c0_96 = arith.constant 0 : index
    %144 = vector.load %arg9[%c64_95, %c0_96] : memref<304x256xbf16, #tpu.memory_space<vmem>>, vector<32x256xbf16>
    tpu.vector_store %arg9[%c64_95, %c0_96], %143 {strides = array<i32>} : memref<304x256xbf16, #tpu.memory_space<vmem>>, vector<32x256xbf16>,
    %c1_i32_97 = arith.constant 1 : i32
    %145 = tpu.dynamic_rotate %118 by %c1_i32_97 dim 1 : vector<32x256xf32>, i32 -> vector<32x256xf32>
    %c3_98 = arith.constant 3 : index
    %c0_99 = arith.constant 0 : index
    %146 = vector.load %arg5[%c3_98, %c0_99] : memref<9x256xf32, #tpu.memory_space<vmem>>, vector<1x256xf32>
    %147 = vector.broadcast %146 : vector<1x256xf32> to vector<32x256xf32>
    %148 = arith.mulf %145, %147 : vector<32x256xf32>
    %149 = arith.truncf %148 : vector<32x256xf32> to vector<32x256xbf16>
    %c96_100 = arith.constant 96 : index
    %c0_101 = arith.constant 0 : index
    %150 = vector.load %arg9[%c96_100, %c0_101] : memref<304x256xbf16, #tpu.memory_space<vmem>>, vector<32x256xbf16>
    tpu.vector_store %arg9[%c96_100, %c0_101], %149 {strides = array<i32>} : memref<304x256xbf16, #tpu.memory_space<vmem>>, vector<32x256xbf16>,
    %151 = arith.truncf %118 : vector<32x256xf32> to vector<32x256xbf16>
    %c128_102 = arith.constant 128 : index
    %c0_103 = arith.constant 0 : index
    %152 = vector.load %arg9[%c128_102, %c0_103] : memref<304x256xbf16, #tpu.memory_space<vmem>>, vector<32x256xbf16>
    tpu.vector_store %arg9[%c128_102, %c0_103], %151 {strides = array<i32>} : memref<304x256xbf16, #tpu.memory_space<vmem>>, vector<32x256xbf16>,
    %c255_i32_104 = arith.constant 255 : i32
    %153 = tpu.dynamic_rotate %118 by %c255_i32_104 dim 1 : vector<32x256xf32>, i32 -> vector<32x256xf32>
    %c5_105 = arith.constant 5 : index
    %c0_106 = arith.constant 0 : index
    %154 = vector.load %arg5[%c5_105, %c0_106] : memref<9x256xf32, #tpu.memory_space<vmem>>, vector<1x256xf32>
    %155 = vector.broadcast %154 : vector<1x256xf32> to vector<32x256xf32>
    %156 = arith.mulf %153, %155 : vector<32x256xf32>
    %157 = arith.truncf %156 : vector<32x256xf32> to vector<32x256xbf16>
    %c160 = arith.constant 160 : index
    %c0_107 = arith.constant 0 : index
    %158 = vector.load %arg9[%c160, %c0_107] : memref<304x256xbf16, #tpu.memory_space<vmem>>, vector<32x256xbf16>
    tpu.vector_store %arg9[%c160, %c0_107], %157 {strides = array<i32>} : memref<304x256xbf16, #tpu.memory_space<vmem>>, vector<32x256xbf16>,
    %c241_i32_108 = arith.constant 241 : i32
    %159 = tpu.dynamic_rotate %118 by %c241_i32_108 dim 1 : vector<32x256xf32>, i32 -> vector<32x256xf32>
    %c6_109 = arith.constant 6 : index
    %c0_110 = arith.constant 0 : index
    %160 = vector.load %arg5[%c6_109, %c0_110] : memref<9x256xf32, #tpu.memory_space<vmem>>, vector<1x256xf32>
    %161 = vector.broadcast %160 : vector<1x256xf32> to vector<32x256xf32>
    %162 = arith.mulf %159, %161 : vector<32x256xf32>
    %163 = arith.truncf %162 : vector<32x256xf32> to vector<32x256xbf16>
    %c192 = arith.constant 192 : index
    %c0_111 = arith.constant 0 : index
    %164 = vector.load %arg9[%c192, %c0_111] : memref<304x256xbf16, #tpu.memory_space<vmem>>, vector<32x256xbf16>
    tpu.vector_store %arg9[%c192, %c0_111], %163 {strides = array<i32>} : memref<304x256xbf16, #tpu.memory_space<vmem>>, vector<32x256xbf16>,
    %c240_i32_112 = arith.constant 240 : i32
    %165 = tpu.dynamic_rotate %118 by %c240_i32_112 dim 1 : vector<32x256xf32>, i32 -> vector<32x256xf32>
    %c7_113 = arith.constant 7 : index
    %c0_114 = arith.constant 0 : index
    %166 = vector.load %arg5[%c7_113, %c0_114] : memref<9x256xf32, #tpu.memory_space<vmem>>, vector<1x256xf32>
    %167 = vector.broadcast %166 : vector<1x256xf32> to vector<32x256xf32>
    %168 = arith.mulf %165, %167 : vector<32x256xf32>
    %169 = arith.truncf %168 : vector<32x256xf32> to vector<32x256xbf16>
    %c224 = arith.constant 224 : index
    %c0_115 = arith.constant 0 : index
    %170 = vector.load %arg9[%c224, %c0_115] : memref<304x256xbf16, #tpu.memory_space<vmem>>, vector<32x256xbf16>
    tpu.vector_store %arg9[%c224, %c0_115], %169 {strides = array<i32>} : memref<304x256xbf16, #tpu.memory_space<vmem>>, vector<32x256xbf16>,
    %c239_i32_116 = arith.constant 239 : i32
    %171 = tpu.dynamic_rotate %118 by %c239_i32_116 dim 1 : vector<32x256xf32>, i32 -> vector<32x256xf32>
    %c8_117 = arith.constant 8 : index
    %c0_118 = arith.constant 0 : index
    %172 = vector.load %arg5[%c8_117, %c0_118] : memref<9x256xf32, #tpu.memory_space<vmem>>, vector<1x256xf32>
    %173 = vector.broadcast %172 : vector<1x256xf32> to vector<32x256xf32>
    %174 = arith.mulf %171, %173 : vector<32x256xf32>
    %175 = arith.truncf %174 : vector<32x256xf32> to vector<32x256xbf16>
    %c256 = arith.constant 256 : index
    %c0_119 = arith.constant 0 : index
    %176 = vector.load %arg9[%c256, %c0_119] : memref<304x256xbf16, #tpu.memory_space<vmem>>, vector<32x256xbf16>
    tpu.vector_store %arg9[%c256, %c0_119], %175 {strides = array<i32>} : memref<304x256xbf16, #tpu.memory_space<vmem>>, vector<32x256xbf16>,
    %c0_120 = arith.constant 0 : index
    %c0_121 = arith.constant 0 : index
    %177 = vector.load %arg4[%c0_120, %c0_121] : memref<8x304xbf16, #tpu.memory_space<vmem>>, vector<8x304xbf16>
    %c0_122 = arith.constant 0 : index
    %c0_123 = arith.constant 0 : index
    %178 = vector.load %arg9[%c0_122, %c0_123] : memref<304x256xbf16, #tpu.memory_space<vmem>>, vector<304x256xbf16>
    %cst_124 = arith.constant dense<0.000000e+00> : vector<8x256xf32>
    %179 = tpu.matmul %177, %178, %cst_124 {dimension_numbers = #tpu.dot_dimension_numbers<[1], [0], [0], [1], [0, 0, 1, 1], [], []>} : vector<8x304xbf16>, vector<304x256xbf16>, vector<8x256xf32> -> vector<8x256xf32>
    %180 = vector.extract_strided_slice %179 {offsets = [0, 0], sizes = [1, 256], strides = [1, 1]} : vector<8x256xf32> to vector<1x256xf32>
    %c0_125 = arith.constant 0 : index
    %c0_126 = arith.constant 0 : index
    %c0_127 = arith.constant 0 : index
    %181 = vector.load %arg6[%c0_125, %c0_126, %c0_127] : memref<1x1x256xf32, #tpu.memory_space<vmem>>, vector<1x1x256xf32>
    %182 = vector.shape_cast %181 : vector<1x1x256xf32> to vector<1x256xf32>
    %183 = vector.shape_cast %180 : vector<1x256xf32> to vector<1x1x256xf32>
    tpu.vector_store %arg6[%c0_125, %c0_126, %c0_127], %183 {strides = array<i32>} : memref<1x1x256xf32, #tpu.memory_space<vmem>>, vector<1x1x256xf32>,
    return
  }
  func.func @transform_0(%arg0: i32) -> (i32, i32, i32) {
    %c0_i32 = arith.constant 0 : i32
    %c0_i32_0 = arith.constant 0 : i32
    %c0_i32_1 = arith.constant 0 : i32
    return %arg0, %c0_i32, %c0_i32_0 : i32, i32, i32
  }
  func.func @transform_1(%arg0: i32) -> (i32, i32) {
    %c0_i32 = arith.constant 0 : i32
    %c0_i32_0 = arith.constant 0 : i32
    %c0_i32_1 = arith.constant 0 : i32
    return %c0_i32, %c0_i32_0 : i32, i32
  }
  func.func @transform_2(%arg0: i32) -> (i32, i32) {
    %c0_i32 = arith.constant 0 : i32
    %c0_i32_0 = arith.constant 0 : i32
    %c0_i32_1 = arith.constant 0 : i32
    return %c0_i32, %c0_i32_0 : i32, i32
  }
  func.func @transform_3(%arg0: i32) -> (i32, i32) {
    %c0_i32 = arith.constant 0 : i32
    %c0_i32_0 = arith.constant 0 : i32
    %c0_i32_1 = arith.constant 0 : i32
    return %c0_i32, %c0_i32_0 : i32, i32
  }
  func.func @transform_4(%arg0: i32) -> (i32, i32) {
    %c0_i32 = arith.constant 0 : i32
    %c0_i32_0 = arith.constant 0 : i32
    %c0_i32_1 = arith.constant 0 : i32
    return %c0_i32, %c0_i32_0 : i32, i32
  }
  func.func @transform_5(%arg0: i32) -> (i32, i32, i32) {
    %c0_i32 = arith.constant 0 : i32
    %c0_i32_0 = arith.constant 0 : i32
    %c0_i32_1 = arith.constant 0 : i32
    return %arg0, %c0_i32, %c0_i32_0 : i32, i32, i32
  }
}

</mosaic_0001>

<llo_original>
// kernel: _edge_net_pallas.1
$region0: #{_edge_net_pallas.1}
  #allocation0 [shape = 'u32[]', space=smem, size = 0x4, offset = 0x4, fixed_abs, tag = 'smem constant byte address 0x4 - core index']
  #allocation1 [shape = 'u32[72,128]{1,0:T(1,128)}', space=vmem, size = 0x9000, scoped, tag = 'internal scratch']
  #allocation2 [shape = 'f32[80,256]{1,0:T(8,128)}', space=vmem, size = 0x14000, scoped, tag = 'scratch operand']
  #allocation3 [shape = 'bf16[160,256]{1,0:T(8,128)(2,1)}', space=vmem, size = 0x14000, scoped, tag = 'scratch operand']
  #allocation4 [shape = 'bf16[304,256]{1,0:T(8,128)(2,1)}', space=vmem, size = 0x26000, scoped, tag = 'scratch operand']
  %s0 = inlined_call_operand.vmem [shape: f32[2,8,256], index: 0, kind: input, shape index: {}]
  %s1 = inlined_call_operand.vmem [shape: bf16[16,80], index: 1, kind: input, shape index: {}]
  %s2 = inlined_call_operand.vmem [shape: bf16[32,160], index: 2, kind: input, shape index: {}]
  %s3 = inlined_call_operand.vmem [shape: bf16[8,304], index: 3, kind: input, shape index: {}]
  %s4 = inlined_call_operand.vmem [shape: f32[9,256], index: 4, kind: input, shape index: {}]
  %s5 = inlined_call_operand.vmem [shape: f32[2,1,256], index: 5, kind: output, shape index: {}]
  %s6 = sld [smem:[#allocation0]]
  $region53: #{_edge_net_pallas.1} parent=0
    _
  %s8 = ssub.s32 1, %s6
  %s9 = scalar_select 0, %s8, %s6
  loop: start=0, step=1, limit=4
  $region2: #{_edge_net_pallas.1} parent=0 // loop_pre_header
    _
  $region3: #{_edge_net_pallas.1} parent=0 // loop_header
    %s11 = sphi 0, %s15
    %p12 = scmp.ge.s32.totalorder %s11, 4
    %s21 = sphi 0, %s23
    %s24 = sphi 0, %s21
    %s25 = sphi 0, %s24
    %s41 = sphi 0, %s25
    %s45 = sphi 0, %s45
    %s47 = sphi 0, %s45
    %s48 = sphi 0, %s47
    %s62 = sphi 0, %s48
    %s66 = sphi 0, %s66
    %s68 = sphi 0, %s66
    %s69 = sphi 0, %s68
    %s83 = sphi 0, %s69
    %s87 = sphi 0, %s87
    %s89 = sphi 0, %s87
    %s90 = sphi 0, %s89
    %s104 = sphi 0, %s90
    %s108 = sphi 0, %s108
    %s110 = sphi 0, %s108
    %s111 = sphi 0, %s110
    %s125 = sphi 0, %s111
    %s131 = sphi 0, %s133
    %s134 = sphi 0, %s131
    %s135 = sphi 0, %s134
    %s151 = sphi 0, %s135
  $region4: #{_edge_net_pallas.1} parent=0 // loop_header_branch
    %14 = sbr.rel (%p12) target = $region8
  $region5: #{_edge_net_pallas.1} parent=0 // loop_body
    %s16 = ssub.s32 %s11, 1
    %s17 = ssub.s32 %s11, 2
    %s18 = sadd.s32 %s11, 1
    %s19 = ssub.s32 %s11, %s18
    %p20 = scmp.eq.s32.totalorder %s19, 0
    %s22 = sadd.s32 %s21, 1
    %s23 = scalar_select %p20, %s21, %s22
    %p26 = pneg %p20
    %p27 = scmp.eq.s32.totalorder %s11, 1
    %p28 = por %p26, %p27
    %p29 = scmp.ne.s32.totalorder %s21, %s24
    %p30 = scmp.eq.s32.totalorder %s11, 0
    %p31 = por %p29, %p30
    %p32 = scmp.ne.s32.totalorder %s21, %s24
    %p33 = scmp.eq.s32.totalorder %s16, 1
    %p34 = por %p32, %p33
    %p35 = scmp.ne.s32.totalorder %s24, %s25
    %p36 = scmp.eq.s32.totalorder %s16, 0
    %p37 = por %p35, %p36
    %p38 = scmp.ne.s32.totalorder %s24, %s25
    %p39 = scmp.eq.s32.totalorder %s17, 1
    %p40 = por %p38, %p39
    %p42 = scmp.ne.s32.totalorder %s25, %s41
    %p43 = scmp.eq.s32.totalorder %s17, 0
    %p44 = por %p42, %p43
    %s46 = sadd.s32 %s45, 1
    %p49 = scmp.eq.s32.totalorder %s11, 1
    %p50 = scmp.ne.s32.totalorder %s45, %s47
    %p51 = scmp.eq.s32.totalorder %s11, 0
    %p52 = por %p50, %p51
    %p53 = scmp.ne.s32.totalorder %s45, %s47
    %p54 = scmp.eq.s32.totalorder %s16, 1
    %p55 = por %p53, %p54
    %p56 = scmp.ne.s32.totalorder %s47, %s48
    %p57 = scmp.eq.s32.totalorder %s16, 0
    %p58 = por %p56, %p57
    %p59 = scmp.ne.s32.totalorder %s47, %s48
    %p60 = scmp.eq.s32.totalorder %s17, 1
    %p61 = por %p59, %p60
    %p63 = scmp.ne.s32.totalorder %s48, %s62
    %p64 = scmp.eq.s32.totalorder %s17, 0
    %p65 = por %p63, %p64
    %s67 = sadd.s32 %s66, 1
    %p70 = scmp.eq.s32.totalorder %s11, 1
    %p71 = scmp.ne.s32.totalorder %s66, %s68
    %p72 = scmp.eq.s32.totalorder %s11, 0
    %p73 = por %p71, %p72
    %p74 = scmp.ne.s32.totalorder %s66, %s68
    %p75 = scmp.eq.s32.totalorder %s16, 1
    %p76 = por %p74, %p75
    %p77 = scmp.ne.s32.totalorder %s68, %s69
    %p78 = scmp.eq.s32.totalorder %s16, 0
    %p79 = por %p77, %p78
    %p80 = scmp.ne.s32.totalorder %s68, %s69
    %p81 = scmp.eq.s32.totalorder %s17, 1
    %p82 = por %p80, %p81
    %p84 = scmp.ne.s32.totalorder %s69, %s83
    %p85 = scmp.eq.s32.totalorder %s17, 0
    %p86 = por %p84, %p85
    %s88 = sadd.s32 %s87, 1
    %p91 = scmp.eq.s32.totalorder %s11, 1
    %p92 = scmp.ne.s32.totalorder %s87, %s89
    %p93 = scmp.eq.s32.totalorder %s11, 0
    %p94 = por %p92, %p93
    %p95 = scmp.ne.s32.totalorder %s87, %s89
    %p96 = scmp.eq.s32.totalorder %s16, 1
    %p97 = por %p95, %p96
    %p98 = scmp.ne.s32.totalorder %s89, %s90
    %p99 = scmp.eq.s32.totalorder %s16, 0
    %p100 = por %p98, %p99
    %p101 = scmp.ne.s32.totalorder %s89, %s90
    %p102 = scmp.eq.s32.totalorder %s17, 1
    %p103 = por %p101, %p102
    %p105 = scmp.ne.s32.totalorder %s90, %s104
    %p106 = scmp.eq.s32.totalorder %s17, 0
    %p107 = por %p105, %p106
    %s109 = sadd.s32 %s108, 1
    %p112 = scmp.eq.s32.totalorder %s11, 1
    %p113 = scmp.ne.s32.totalorder %s108, %s110
    %p114 = scmp.eq.s32.totalorder %s11, 0
    %p115 = por %p113, %p114
    %p116 = scmp.ne.s32.totalorder %s108, %s110
    %p117 = scmp.eq.s32.totalorder %s16, 1
    %p118 = por %p116, %p117
    %p119 = scmp.ne.s32.totalorder %s110, %s111
    %p120 = scmp.eq.s32.totalorder %s16, 0
    %p121 = por %p119, %p120
    %p122 = scmp.ne.s32.totalorder %s110, %s111
    %p123 = scmp.eq.s32.totalorder %s17, 1
    %p124 = por %p122, %p123
    %p126 = scmp.ne.s32.totalorder %s111, %s125
    %p127 = scmp.eq.s32.totalorder %s17, 0
    %p128 = por %p126, %p127
    %s129 = ssub.s32 %s11, %s18
    %p130 = scmp.eq.s32.totalorder %s129, 0
    %s132 = sadd.s32 %s131, 1
    %s133 = scalar_select %p130, %s131, %s132
    %p136 = pneg %p130
    %p137 = scmp.eq.s32.totalorder %s11, 1
    %p138 = por %p136, %p137
    %p139 = scmp.ne.s32.totalorder %s131, %s134
    %p140 = scmp.eq.s32.totalorder %s11, 0
    %p141 = por %p139, %p140
    %p142 = scmp.ne.s32.totalorder %s131, %s134
    %p143 = scmp.eq.s32.totalorder %s16, 1
    %p144 = por %p142, %p143
    %p145 = scmp.ne.s32.totalorder %s134, %s135
    %p146 = scmp.eq.s32.totalorder %s16, 0
    %p147 = por %p145, %p146
    %p148 = scmp.ne.s32.totalorder %s134, %s135
    %p149 = scmp.eq.s32.totalorder %s17, 1
    %p150 = por %p148, %p149
    %p152 = scmp.ne.s32.totalorder %s135, %s151
    %p153 = scmp.eq.s32.totalorder %s17, 0
    %p154 = por %p152, %p153
    %p155 = scmp.le.s32.totalorder 1, %s11
    %p156 = scmp.lt.s32.totalorder %s11, 3
    %p157 = pnand %p155, %p156
    %p158 = pneg %p157
    // Predicated region
    $region9: #{_edge_net_pallas.1} parent=5 // pred_check
      _
    $region10: #{_edge_net_pallas.1} parent=5 // pred_check_branch
      %160 = sbr.rel (%p157) target = $region12
    $region11: #{_edge_net_pallas.1} parent=5 // pred_region
      %s161 = ssub.s32 %s11, 1
      // Predicated region
      $region13: #{_edge_net_pallas.1} parent=11 // pred_check
        %p162 = pneg %p58
      $region14: #{_edge_net_pallas.1} parent=11 // pred_check_branch
        %164 = sbr.rel (%p162) target = $region16
      $region15: #{_edge_net_pallas.1} parent=11 // pred_region
        _
      $region16: #{_edge_net_pallas.1} parent=11 // pred_fallthru
        _
      // Predicated region
      $region17: #{_edge_net_pallas.1} parent=11 // pred_check
        %p165 = pneg %p79
      $region18: #{_edge_net_pallas.1} parent=11 // pred_check_branch
        %167 = sbr.rel (%p165) target = $region20
      $region19: #{_edge_net_pallas.1} parent=11 // pred_region
        _
      $region20: #{_edge_net_pallas.1} parent=11 // pred_fallthru
        _
      // Predicated region
      $region21: #{_edge_net_pallas.1} parent=11 // pred_check
        %p168 = pneg %p100
      $region22: #{_edge_net_pallas.1} parent=11 // pred_check_branch
        %170 = sbr.rel (%p168) target = $region24
      $region23: #{_edge_net_pallas.1} parent=11 // pred_region
        _
      $region24: #{_edge_net_pallas.1} parent=11 // pred_fallthru
        _
      // Predicated region
      $region25: #{_edge_net_pallas.1} parent=11 // pred_check
        %p171 = pneg %p121
      $region26: #{_edge_net_pallas.1} parent=11 // pred_check_branch
        %173 = sbr.rel (%p171) target = $region28
      $region27: #{_edge_net_pallas.1} parent=11 // pred_region
        _
      $region28: #{_edge_net_pallas.1} parent=11 // pred_fallthru
        _
    $region12: #{_edge_net_pallas.1} parent=5 // pred_fallthru
      _
    %p174 = scmp.lt.s32.totalorder %s11, 2
    // Predicated region
    $region29: #{_edge_net_pallas.1} parent=5 // pred_check
      %p175 = pneg %p174
    $region30: #{_edge_net_pallas.1} parent=5 // pred_check_branch
      %177 = sbr.rel (%p175) target = $region32
    $region31: #{_edge_net_pallas.1} parent=5 // pred_region
      // Predicated region
      $region33: #{_edge_net_pallas.1} parent=31 // pred_check
        %p178 = pneg %p31
      $region34: #{_edge_net_pallas.1} parent=31 // pred_check_branch
        %180 = sbr.rel (%p178) target = $region36
      $region35: #{_edge_net_pallas.1} parent=31 // pred_region
        %p181 = scmp.lt.s32.totalorder %s11, 1
        %s182 = scalar_select %p181, %s11, 1
        %s183 = smul.addr %s182, 2
        %s184 = smul.addr %s183, 8
        %s185 = scalar_lea.vmem %s0, %s184
      $region36: #{_edge_net_pallas.1} parent=31 // pred_fallthru
        _
    $region32: #{_edge_net_pallas.1} parent=5 // pred_fallthru
      _
    %p186 = scmp.le.s32.totalorder 1, %s11
    %p187 = scmp.lt.s32.totalorder %s11, 3
    %p188 = pnand %p186, %p187
    %p189 = pneg %p188
    // Predicated region
    $region37: #{_edge_net_pallas.1} parent=5 // pred_check
      _
    $region38: #{_edge_net_pallas.1} parent=5 // pred_check_branch
      %191 = sbr.rel (%p188) target = $region40
    $region39: #{_edge_net_pallas.1} parent=5 // pred_region
      %s192 = ssub.s32 %s11, 1
      %p193 = scmp.lt.s32.totalorder %s16, 1
      %s194 = scalar_select %p193, %s16, 1
      %s195 = smul.addr %s194, 2
      %s196 = smul.addr %s195, 8
      %s197 = scalar_lea.vmem %s0, %s196
      %p198 = pneg %p37
      %p199 = pneg %p34
      %p200 = pneg %p58
      %p201 = pneg %p55
      %p202 = pneg %p79
      %p203 = pneg %p76
      %p204 = pneg %p100
      %p205 = pneg %p97
      %p206 = pneg %p121
      %p207 = pneg %p118
      %p208 = pneg %p147
      %p209 = pneg %p144
      %p210 = scmp.lt.s32.totalorder %s16, 1
      %s211 = scalar_select %p210, %s16, 1
      %s212 = smul.addr %s211, 2
      %s213 = scalar_lea.vmem %s5, %s212
      %p214 = scmp.lt.s32.totalorder %s16, 1
      %s215 = scalar_select %p214, %s16, 1
      %s216 = smul.addr %s215, 2
      %s217 = smul.addr %s216, 8
      %s218 = scalar_lea.vmem %s0, %s217
      %p219 = scmp.lt.s32.totalorder %s16, 1
      %s220 = scalar_select %p219, %s16, 1
      %s221 = smul.addr %s220, 2
      %s222 = scalar_lea.vmem %s5, %s221
      %v224 = vld [vmem:[%s218] sm:$0xff]
      %v225 = vld [vmem:[%s218 + $0x8] sm:$0xff]
      %v226 = vlaneseq
      %v227 = vshrl.u32 %v226, 7
      %vm228 = vcmp.eq.s32.totalorder %v227, 0
      %v229 = vsel %vm228, 1.0, 0.0
      %230 = vst [vmem:[#allocation2 + $0x90] sm:$0xff] %v229
      %231 = vst [vmem:[#allocation2 + $0x98] sm:$0xff] %v229
      %232 = vrot.lane.b32.xlu0 %v224, 17
      %v233 = vpop.permute.xlu0 %232
      %234 = vrot.lane.b32.xlu0 %v225, 17
      %v235 = vpop.permute.xlu0 %234
      %v236 = vlaneseq
      %v237 = vand.u32 %v236, 127
      %vm238 = vcmp.lt.s32.totalorder %v237, 17
      %v239 = vsel %vm238, %v233, %v235
      %v240 = vsel %vm238, %v235, %v233
      %v241 = vld [vmem:[%s4] ss:$8 sm:$0x3]
      %v243 = vperm.slane %v241, 0
      %v244 = vperm.slane %v241, 1
      %v247 = vmul.f32 %v240, %v243
      %v248 = vmul.f32 %v239, %v244
      %249 = vst [vmem:[#allocation2] sm:$0xff] %v247
      %250 = vst [vmem:[#allocation2 + $0x8] sm:$0xff] %v248
      %251 = vrot.lane.b32.xlu0 %v224, 16
      %v252 = vpop.permute.xlu0 %251
      %253 = vrot.lane.b32.xlu0 %v225, 16
      %v254 = vpop.permute.xlu0 %253
      %vm255 = vcmp.lt.s32.totalorder %v237, 16
      %v256 = vsel %vm255, %v252, %v254
      %v257 = vsel %vm255, %v254, %v252
      %s258 = scalar_lea.vmem %s4, 1
      %v259 = vld [vmem:[%s258] ss:$8 sm:$0x3]
      %v261 = vperm.slane %v259, 0
      %v262 = vperm.slane %v259, 1
      %v265 = vmul.f32 %v257, %v261
      %v266 = vmul.f32 %v256, %v262
      %267 = vst [vmem:[#allocation2 + $0x10] sm:$0xff] %v265
      %268 = vst [vmem:[#allocation2 + $0x18] sm:$0xff] %v266
      %269 = vrot.lane.b32.xlu0 %v224, 15
      %v270 = vpop.permute.xlu0 %269
      %271 = vrot.lane.b32.xlu0 %v225, 15
      %v272 = vpop.permute.xlu0 %271
      %vm273 = vcmp.lt.s32.totalorder %v237, 15
      %v274 = vsel %vm273, %v270, %v272
      %v275 = vsel %vm273, %v272, %v270
      %s276 = scalar_lea.vmem %s4, 2
      %v277 = vld [vmem:[%s276] ss:$8 sm:$0x3]
      %v279 = vperm.slane %v277, 0
      %v280 = vperm.slane %v277, 1
      %v283 = vmul.f32 %v275, %v279
      %v284 = vmul.f32 %v274, %v280
      %285 = vst [vmem:[#allocation2 + $0x20] sm:$0xff] %v283
      %286 = vst [vmem:[#allocation2 + $0x28] sm:$0xff] %v284
      %287 = vrot.lane.b32.xlu0 %v224, 1
      %v288 = vpop.permute.xlu0 %287
      %289 = vrot.lane.b32.xlu0 %v225, 1
      %v290 = vpop.permute.xlu0 %289
      %vm291 = vcmp.lt.s32.totalorder %v237, 1
      %v292 = vsel %vm291, %v288, %v290
      %v293 = vsel %vm291, %v290, %v288
      %s294 = scalar_lea.vmem %s4, 3
      %v295 = vld [vmem:[%s294] ss:$8 sm:$0x3]
      %v297 = vperm.slane %v295, 0
      %v298 = vperm.slane %v295, 1
      %v301 = vmul.f32 %v293, %v297
      %v302 = vmul.f32 %v292, %v298
      %303 = vst [vmem:[#allocation2 + $0x30] sm:$0xff] %v301
      %304 = vst [vmem:[#allocation2 + $0x38] sm:$0xff] %v302
      %305 = vst [vmem:[#allocation2 + $0x40] sm:$0xff] %v224
      %306 = vst [vmem:[#allocation2 + $0x48] sm:$0xff] %v225
      %307 = vrot.lane.b32.xlu0 %v224, 127
      %v308 = vpop.permute.xlu0 %307
      %309 = vrot.lane.b32.xlu0 %v225, 127
      %v310 = vpop.permute.xlu0 %309
      %vm311 = vcmp.lt.s32.totalorder %v237, 127
      %v312 = vsel %vm311, %v308, %v310
      %v313 = vsel %vm311, %v310, %v308
      %s314 = scalar_lea.vmem %s4, 5
      %v315 = vld [vmem:[%s314] ss:$8 sm:$0x3]
      %v317 = vperm.slane %v315, 0
      %v318 = vperm.slane %v315, 1
      %v321 = vmul.f32 %v312, %v317
      %v322 = vmul.f32 %v313, %v318
      %323 = vst [vmem:[#allocation2 + $0x50] sm:$0xff] %v321
      %324 = vst [vmem:[#allocation2 + $0x58] sm:$0xff] %v322
      %325 = vrot.lane.b32.xlu0 %v224, 113
      %v326 = vpop.permute.xlu0 %325
      %327 = vrot.lane.b32.xlu0 %v225, 113
      %v328 = vpop.permute.xlu0 %327
      %vm329 = vcmp.lt.s32.totalorder %v237, 113
      %v330 = vsel %vm329, %v326, %v328
      %v331 = vsel %vm329, %v328, %v326
      %s332 = scalar_lea.vmem %s4, 6
      %v333 = vld [vmem:[%s332] ss:$8 sm:$0x3]
      %v335 = vperm.slane %v333, 0
      %v336 = vperm.slane %v333, 1
      %v339 = vmul.f32 %v330, %v335
      %v340 = vmul.f32 %v331, %v336
      %341 = vst [vmem:[#allocation2 + $0x60] sm:$0xff] %v339
      %342 = vst [vmem:[#allocation2 + $0x68] sm:$0xff] %v340
      %343 = vrot.lane.b32.xlu0 %v224, 112
      %v344 = vpop.permute.xlu0 %343
      %345 = vrot.lane.b32.xlu0 %v225, 112
      %v346 = vpop.permute.xlu0 %345
      %vm347 = vcmp.lt.s32.totalorder %v237, 112
      %v348 = vsel %vm347, %v344, %v346
      %v349 = vsel %vm347, %v346, %v344
      %s350 = scalar_lea.vmem %s4, 7
      %v351 = vld [vmem:[%s350] ss:$8 sm:$0x3]
      %v353 = vperm.slane %v351, 0
      %v354 = vperm.slane %v351, 1
      %v357 = vmul.f32 %v348, %v353
      %v358 = vmul.f32 %v349, %v354
      %359 = vst [vmem:[#allocation2 + $0x70] sm:$0xff] %v357
      %360 = vst [vmem:[#allocation2 + $0x78] sm:$0xff] %v358
      %361 = vrot.lane.b32.xlu0 %v224, 111
      %v362 = vpop.permute.xlu0 %361
      %363 = vrot.lane.b32.xlu0 %v225, 111
      %v364 = vpop.permute.xlu0 %363
      %vm365 = vcmp.lt.s32.totalorder %v237, 111
      %v366 = vsel %vm365, %v362, %v364
      %v367 = vsel %vm365, %v364, %v362
      %s368 = scalar_lea.vmem %s4, 16
      %v369 = vld [vmem:[%s368] ss:$8 sm:$0x3]
      %v371 = vperm.slane %v369, 0
      %v372 = vperm.slane %v369, 1
      %v375 = vmul.f32 %v366, %v371
      %v376 = vmul.f32 %v367, %v372
      %377 = vst [vmem:[#allocation2 + $0x80] sm:$0xff] %v375
      %378 = vst [vmem:[#allocation2 + $0x88] sm:$0xff] %v376
      %v379 = vld [vmem:[%s1] sm:$0xf]
      %v380 = vld [vmem:[%s1 + $0x4] sm:$0xf]
      %v381 = vld [vmem:[#allocation2] sm:$0xff]
      %v382 = vld [vmem:[#allocation2 + $0x8] sm:$0xff]
      %v383 = vld [vmem:[#allocation2 + $0x10] sm:$0xff]
      %v384 = vld [vmem:[#allocation2 + $0x18] sm:$0xff]
      %v385 = vld [vmem:[#allocation2 + $0x20] sm:$0xff]
      %v386 = vld [vmem:[#allocation2 + $0x28] sm:$0xff]
      %v387 = vld [vmem:[#allocation2 + $0x30] sm:$0xff]
      %v388 = vld [vmem:[#allocation2 + $0x38] sm:$0xff]
      %v389 = vld [vmem:[#allocation2 + $0x40] sm:$0xff]
      %v390 = vld [vmem:[#allocation2 + $0x48] sm:$0xff]
      %v391 = vld [vmem:[#allocation2 + $0x50] sm:$0xff]
      %v392 = vld [vmem:[#allocation2 + $0x58] sm:$0xff]
      %v393 = vld [vmem:[#allocation2 + $0x60] sm:$0xff]
      %v394 = vld [vmem:[#allocation2 + $0x68] sm:$0xff]
      %v395 = vld [vmem:[#allocation2 + $0x70] sm:$0xff]
      %v396 = vld [vmem:[#allocation2 + $0x78] sm:$0xff]
      %v397 = vld [vmem:[#allocation2 + $0x80] sm:$0xff]
      %v398 = vld [vmem:[#allocation2 + $0x88] sm:$0xff]
      %v399 = vld [vmem:[#allocation2 + $0x90] sm:$0xff]
      %v400 = vld [vmem:[#allocation2 + $0x98] sm:$0xff]
      %v401 = vpack.c.bf16 %v383, %v381
      %v402 = vpack.c.bf16 %v384, %v382
      %v403 = vpack.c.bf16 %v387, %v385
      %v404 = vpack.c.bf16 %v388, %v386
      %v405 = vpack.c.bf16 %v391, %v389
      %v406 = vpack.c.bf16 %v392, %v390
      %v407 = vpack.c.bf16 %v395, %v393
      %v408 = vpack.c.bf16 %v396, %v394
      %v409 = vpack.c.bf16 %v399, %v397
      %v410 = vpack.c.bf16 %v400, %v398
      %v413 = vunpack.c.l.b16 %v379
      %v414 = vunpack.c.l.b16 %v380
      %v415 = vpack.c.b16 %v414, %v413
      %vm416 = vcmask 654336
      %v418 = vsel %vm416, %v415, 0
      %420 = vmatpush.bf16.msra.mxu0 0
      %421 = vmatpush.bf16.msra.mxu0 0
      %422 = vmatpush.bf16.msra.mxu0 0
      %423 = vmatpush.bf16.msra.mxu0 %v409
      %424 = vmatpush.bf16.msra.mxu0 %v407
      %425 = vmatpush.bf16.msra.mxu0 %v405
      %426 = vmatpush.bf16.msra.mxu0 %v403
      %427 = vmatpush.bf16.msra.mxu0 %v401
      %428 = vmatmul.bf16.gmra.mxu0 %v418
      %v429 = vpop.f32.mrf.mxu0
      %v430 = vadd.f32 0.0, %v429
      %v431 = vpop.f32.mrf.mxu0
      %v432 = vadd.f32 0.0, %v431
      %433 = vdwg.mxu0
      %434 = vmatpush.bf16.msra.mxu0 0
      %435 = vmatpush.bf16.msra.mxu0 0
      %436 = vmatpush.bf16.msra.mxu0 0
      %437 = vmatpush.bf16.msra.mxu0 %v410
      %438 = vmatpush.bf16.msra.mxu0 %v408
      %439 = vmatpush.bf16.msra.mxu0 %v406
      %440 = vmatpush.bf16.msra.mxu0 %v404
      %441 = vmatpush.bf16.msra.mxu0 %v402
      %442 = vmatmul.bf16.gmra.mxu0 %v418
      %v443 = vpop.f32.mrf.mxu0
      %v444 = vadd.f32 0.0, %v443
      %v445 = vpop.f32.mrf.mxu0
      %v446 = vadd.f32 0.0, %v445
      %447 = vdwg.mxu0
      %v448 = vmax.f32 %v430, 0.0
      %v449 = vmax.f32 %v444, 0.0
      %v450 = vmax.f32 %v432, 0.0
      %v451 = vmax.f32 %v446, 0.0
      %v452 = vadd.s32 %v227, 8
      %vm453 = vcmp.eq.s32.totalorder %v452, 0
      %v454 = vsel %vm453, 1.0, 0.0
      %v455 = vpack.c.bf16 %v229, %v229
      %v456 = vpack.c.bf16 %v454, %v454
      %457 = vst [vmem:[#allocation3 + $0x90] sm:$0xff] %v455
      %458 = vst [vmem:[#allocation3 + $0x98] sm:$0xff] %v456
      %459 = vrot.lane.b32.xlu0 %v448, 17
      %v460 = vpop.permute.xlu0 %459
      %461 = vrot.lane.b32.xlu0 %v450, 17
      %v462 = vpop.permute.xlu0 %461
      %463 = vrot.lane.b32.xlu0 %v449, 17
      %v464 = vpop.permute.xlu0 %463
      %465 = vrot.lane.b32.xlu0 %v451, 17
      %v466 = vpop.permute.xlu0 %465
      %v467 = vsel %vm238, %v460, %v464
      %v468 = vsel %vm238, %v462, %v466
      %v469 = vsel %vm238, %v464, %v460
      %v470 = vsel %vm238, %v466, %v462
      %v471 = vld [vmem:[%s4] ss:$8 sm:$0x3]
      %v473 = vperm.slane %v471, 0
      %v474 = vperm.slane %v471, 1
      %v477 = vmul.f32 %v469, %v473
      %v478 = vmul.f32 %v467, %v474
      %v479 = vmul.f32 %v470, %v473
      %v480 = vmul.f32 %v468, %v474
      %v481 = vpack.c.bf16 %v478, %v477
      %v482 = vpack.c.bf16 %v480, %v479
      %483 = vst [vmem:[#allocation3] sm:$0xff] %v481
      %484 = vst [vmem:[#allocation3 + $0x8] sm:$0xff] %v482
      %485 = vrot.lane.b32.xlu0 %v448, 16
      %v486 = vpop.permute.xlu0 %485
      %487 = vrot.lane.b32.xlu0 %v450, 16
      %v488 = vpop.permute.xlu0 %487
      %489 = vrot.lane.b32.xlu0 %v449, 16
      %v490 = vpop.permute.xlu0 %489
      %491 = vrot.lane.b32.xlu0 %v451, 16
      %v492 = vpop.permute.xlu0 %491
      %v493 = vsel %vm255, %v486, %v490
      %v494 = vsel %vm255, %v488, %v492
      %v495 = vsel %vm255, %v490, %v486
      %v496 = vsel %vm255, %v492, %v488
      %v497 = vld [vmem:[%s258] ss:$8 sm:$0x3]
      %v499 = vperm.slane %v497, 0
      %v500 = vperm.slane %v497, 1
      %v503 = vmul.f32 %v495, %v499
      %v504 = vmul.f32 %v493, %v500
      %v505 = vmul.f32 %v496, %v499
      %v506 = vmul.f32 %v494, %v500
      %v507 = vpack.c.bf16 %v504, %v503
      %v508 = vpack.c.bf16 %v506, %v505
      %509 = vst [vmem:[#allocation3 + $0x10] sm:$0xff] %v507
      %510 = vst [vmem:[#allocation3 + $0x18] sm:$0xff] %v508
      %511 = vrot.lane.b32.xlu0 %v448, 15
      %v512 = vpop.permute.xlu0 %511
      %513 = vrot.lane.b32.xlu0 %v450, 15
      %v514 = vpop.permute.xlu0 %513
      %515 = vrot.lane.b32.xlu0 %v449, 15
      %v516 = vpop.permute.xlu0 %515
      %517 = vrot.lane.b32.xlu0 %v451, 15
      %v518 = vpop.permute.xlu0 %517
      %v519 = vsel %vm273, %v512, %v516
      %v520 = vsel %vm273, %v514, %v518
      %v521 = vsel %vm273, %v516, %v512
      %v522 = vsel %vm273, %v518, %v514
      %v523 = vld [vmem:[%s276] ss:$8 sm:$0x3]
      %v525 = vperm.slane %v523, 0
      %v526 = vperm.slane %v523, 1
      %v529 = vmul.f32 %v521, %v525
      %v530 = vmul.f32 %v519, %v526
      %v531 = vmul.f32 %v522, %v525
      %v532 = vmul.f32 %v520, %v526
      %v533 = vpack.c.bf16 %v530, %v529
      %v534 = vpack.c.bf16 %v532, %v531
      %535 = vst [vmem:[#allocation3 + $0x20] sm:$0xff] %v533
      %536 = vst [vmem:[#allocation3 + $0x28] sm:$0xff] %v534
      %537 = vrot.lane.b32.xlu0 %v448, 1
      %v538 = vpop.permute.xlu0 %537
      %539 = vrot.lane.b32.xlu0 %v450, 1
      %v540 = vpop.permute.xlu0 %539
      %541 = vrot.lane.b32.xlu0 %v449, 1
      %v542 = vpop.permute.xlu0 %541
      %543 = vrot.lane.b32.xlu0 %v451, 1
      %v544 = vpop.permute.xlu0 %543
      %v545 = vsel %vm291, %v538, %v542
      %v546 = vsel %vm291, %v540, %v544
      %v547 = vsel %vm291, %v542, %v538
      %v548 = vsel %vm291, %v544, %v540
      %v549 = vld [vmem:[%s294] ss:$8 sm:$0x3]
      %v551 = vperm.slane %v549, 0
      %v552 = vperm.slane %v549, 1
      %v555 = vmul.f32 %v547, %v551
      %v556 = vmul.f32 %v545, %v552
      %v557 = vmul.f32 %v548, %v551
      %v558 = vmul.f32 %v546, %v552
      %v559 = vpack.c.bf16 %v556, %v555
      %v560 = vpack.c.bf16 %v558, %v557
      %561 = vst [vmem:[#allocation3 + $0x30] sm:$0xff] %v559
      %562 = vst [vmem:[#allocation3 + $0x38] sm:$0xff] %v560
      %v563 = vpack.c.bf16 %v449, %v448
      %v564 = vpack.c.bf16 %v451, %v450
      %565 = vst [vmem:[#allocation3 + $0x40] sm:$0xff] %v563
      %566 = vst [vmem:[#allocation3 + $0x48] sm:$0xff] %v564
      %567 = vrot.lane.b32.xlu0 %v448, 127
      %v568 = vpop.permute.xlu0 %567
      %569 = vrot.lane.b32.xlu0 %v450, 127
      %v570 = vpop.permute.xlu0 %569
      %571 = vrot.lane.b32.xlu0 %v449, 127
      %v572 = vpop.permute.xlu0 %571
      %573 = vrot.lane.b32.xlu0 %v451, 127
      %v574 = vpop.permute.xlu0 %573
      %v575 = vsel %vm311, %v568, %v572
      %v576 = vsel %vm311, %v570, %v574
      %v577 = vsel %vm311, %v572, %v568
      %v578 = vsel %vm311, %v574, %v570
      %v579 = vld [vmem:[%s314] ss:$8 sm:$0x3]
      %v581 = vperm.slane %v579, 0
      %v582 = vperm.slane %v579, 1
      %v585 = vmul.f32 %v575, %v581
      %v586 = vmul.f32 %v577, %v582
      %v587 = vmul.f32 %v576, %v581
      %v588 = vmul.f32 %v578, %v582
      %v589 = vpack.c.bf16 %v586, %v585
      %v590 = vpack.c.bf16 %v588, %v587
      %591 = vst [vmem:[#allocation3 + $0x50] sm:$0xff] %v589
      %592 = vst [vmem:[#allocation3 + $0x58] sm:$0xff] %v590
      %593 = vrot.lane.b32.xlu0 %v448, 113
      %v594 = vpop.permute.xlu0 %593
      %595 = vrot.lane.b32.xlu0 %v450, 113
      %v596 = vpop.permute.xlu0 %595
      %597 = vrot.lane.b32.xlu0 %v449, 113
      %v598 = vpop.permute.xlu0 %597
      %599 = vrot.lane.b32.xlu0 %v451, 113
      %v600 = vpop.permute.xlu0 %599
      %v601 = vsel %vm329, %v594, %v598
      %v602 = vsel %vm329, %v596, %v600
      %v603 = vsel %vm329, %v598, %v594
      %v604 = vsel %vm329, %v600, %v596
      %v605 = vld [vmem:[%s332] ss:$8 sm:$0x3]
      %v607 = vperm.slane %v605, 0
      %v608 = vperm.slane %v605, 1
      %v611 = vmul.f32 %v601, %v607
      %v612 = vmul.f32 %v603, %v608
      %v613 = vmul.f32 %v602, %v607
      %v614 = vmul.f32 %v604, %v608
      %v615 = vpack.c.bf16 %v612, %v611
      %v616 = vpack.c.bf16 %v614, %v613
      %617 = vst [vmem:[#allocation3 + $0x60] sm:$0xff] %v615
      %618 = vst [vmem:[#allocation3 + $0x68] sm:$0xff] %v616
      %619 = vrot.lane.b32.xlu0 %v448, 112
      %v620 = vpop.permute.xlu0 %619
      %621 = vrot.lane.b32.xlu0 %v450, 112
      %v622 = vpop.permute.xlu0 %621
      %623 = vrot.lane.b32.xlu0 %v449, 112
      %v624 = vpop.permute.xlu0 %623
      %625 = vrot.lane.b32.xlu0 %v451, 112
      %v626 = vpop.permute.xlu0 %625
      %v627 = vsel %vm347, %v620, %v624
      %v628 = vsel %vm347, %v622, %v626
      %v629 = vsel %vm347, %v624, %v620
      %v630 = vsel %vm347, %v626, %v622
      %v631 = vld [vmem:[%s350] ss:$8 sm:$0x3]
      %v633 = vperm.slane %v631, 0
      %v634 = vperm.slane %v631, 1
      %v637 = vmul.f32 %v627, %v633
      %v638 = vmul.f32 %v629, %v634
      %v639 = vmul.f32 %v628, %v633
      %v640 = vmul.f32 %v630, %v634
      %v641 = vpack.c.bf16 %v638, %v637
      %v642 = vpack.c.bf16 %v640, %v639
      %643 = vst [vmem:[#allocation3 + $0x70] sm:$0xff] %v641
      %644 = vst [vmem:[#allocation3 + $0x78] sm:$0xff] %v642
      %645 = vrot.lane.b32.xlu0 %v448, 111
      %v646 = vpop.permute.xlu0 %645
      %647 = vrot.lane.b32.xlu0 %v450, 111
      %v648 = vpop.permute.xlu0 %647
      %649 = vrot.lane.b32.xlu0 %v449, 111
      %v650 = vpop.permute.xlu0 %649
      %651 = vrot.lane.b32.xlu0 %v451, 111
      %v652 = vpop.permute.xlu0 %651
      %v653 = vsel %vm365, %v646, %v650
      %v654 = vsel %vm365, %v648, %v652
      %v655 = vsel %vm365, %v650, %v646
      %v656 = vsel %vm365, %v652, %v648
      %v657 = vld [vmem:[%s368] ss:$8 sm:$0x3]
      %v659 = vperm.slane %v657, 0
      %v660 = vperm.slane %v657, 1
      %v663 = vmul.f32 %v653, %v659
      %v664 = vmul.f32 %v655, %v660
      %v665 = vmul.f32 %v654, %v659
      %v666 = vmul.f32 %v656, %v660
      %v667 = vpack.c.bf16 %v664, %v663
      %v668 = vpack.c.bf16 %v666, %v665
      %669 = vst [vmem:[#allocation3 + $0x80] sm:$0xff] %v667
      %670 = vst [vmem:[#allocation3 + $0x88] sm:$0xff] %v668
      %v671 = vld [vmem:[%s2] sm:$0xff]
      %v672 = vld [vmem:[%s2 + $0x8] sm:$0xff]
      %v673 = vld [vmem:[%s2 + $0x10] sm:$0xff]
      %v674 = vld [vmem:[%s2 + $0x18] sm:$0xff]
      %v675 = vld [vmem:[#allocation3] sm:$0xff]
      %v676 = vld [vmem:[#allocation3 + $0x8] sm:$0xff]
      %v677 = vld [vmem:[#allocation3 + $0x10] sm:$0xff]
      %v678 = vld [vmem:[#allocation3 + $0x18] sm:$0xff]
      %v679 = vld [vmem:[#allocation3 + $0x20] sm:$0xff]
      %v680 = vld [vmem:[#allocation3 + $0x28] sm:$0xff]
      %v681 = vld [vmem:[#allocation3 + $0x30] sm:$0xff]
      %v682 = vld [vmem:[#allocation3 + $0x38] sm:$0xff]
      %v683 = vld [vmem:[#allocation3 + $0x40] sm:$0xff]
      %v684 = vld [vmem:[#allocation3 + $0x48] sm:$0xff]
      %v685 = vld [vmem:[#allocation3 + $0x50] sm:$0xff]
      %v686 = vld [vmem:[#allocation3 + $0x58] sm:$0xff]
      %v687 = vld [vmem:[#allocation3 + $0x60] sm:$0xff]
      %v688 = vld [vmem:[#allocation3 + $0x68] sm:$0xff]
      %v689 = vld [vmem:[#allocation3 + $0x70] sm:$0xff]
      %v690 = vld [vmem:[#allocation3 + $0x78] sm:$0xff]
      %v691 = vld [vmem:[#allocation3 + $0x80] sm:$0xff]
      %v692 = vld [vmem:[#allocation3 + $0x88] sm:$0xff]
      %v693 = vld [vmem:[#allocation3 + $0x90] sm:$0xff]
      %v694 = vld [vmem:[#allocation3 + $0x98] sm:$0xff]
      %v699 = vunpack.c.l.b16 %v671
      %v700 = vunpack.c.h.b16 %v671
      %v701 = vunpack.c.l.b16 %v672
      %v702 = vunpack.c.h.b16 %v672
      %v703 = vunpack.c.l.b16 %v673
      %v704 = vunpack.c.h.b16 %v673
      %v705 = vunpack.c.l.b16 %v674
      %v706 = vunpack.c.h.b16 %v674
      %v707 = vpack.c.b16 %v701, %v699
      %v708 = vpack.c.b16 %v702, %v700
      %v709 = vpack.c.b16 %v705, %v703
      %v710 = vpack.c.b16 %v706, %v704
      %v733 = vunpack.c.l.b16 %v675
      %v734 = vunpack.c.h.b16 %v675
      %v735 = vunpack.c.l.b16 %v676
      %v736 = vunpack.c.h.b16 %v676
      %v737 = vunpack.c.l.b16 %v677
      %v738 = vunpack.c.h.b16 %v677
      %v739 = vunpack.c.l.b16 %v678
      %v740 = vunpack.c.h.b16 %v678
      %v741 = vunpack.c.l.b16 %v679
      %v742 = vunpack.c.h.b16 %v679
      %v743 = vunpack.c.l.b16 %v680
      %v744 = vunpack.c.h.b16 %v680
      %v745 = vunpack.c.l.b16 %v681
      %v746 = vunpack.c.h.b16 %v681
      %v747 = vunpack.c.l.b16 %v682
      %v748 = vunpack.c.h.b16 %v682
      %v749 = vunpack.c.l.b16 %v683
      %v750 = vunpack.c.h.b16 %v683
      %v751 = vunpack.c.l.b16 %v684
      %v752 = vunpack.c.h.b16 %v684
      %v753 = vunpack.c.l.b16 %v685
      %v754 = vunpack.c.h.b16 %v685
      %v755 = vunpack.c.l.b16 %v686
      %v756 = vunpack.c.h.b16 %v686
      %v757 = vunpack.c.l.b16 %v687
      %v758 = vunpack.c.h.b16 %v687
      %v759 = vunpack.c.l.b16 %v688
      %v760 = vunpack.c.h.b16 %v688
      %v761 = vunpack.c.l.b16 %v689
      %v762 = vunpack.c.h.b16 %v689
      %v763 = vunpack.c.l.b16 %v690
      %v764 = vunpack.c.h.b16 %v690
      %v765 = vunpack.c.l.b16 %v691
      %v766 = vunpack.c.h.b16 %v691
      %v767 = vunpack.c.l.b16 %v692
      %v768 = vunpack.c.h.b16 %v692
      %v769 = vunpack.c.l.b16 %v693
      %v770 = vunpack.c.h.b16 %v693
      %v771 = vunpack.c.l.b16 %v694
      %v772 = vunpack.c.h.b16 %v694
      %v773 = vpack.c.b16 %v735, %v733
      %v774 = vpack.c.b16 %v736, %v734
      %v775 = vpack.c.b16 %v739, %v737
      %v776 = vpack.c.b16 %v740, %v738
      %v777 = vpack.c.b16 %v743, %v741
      %v778 = vpack.c.b16 %v744, %v742
      %v779 = vpack.c.b16 %v747, %v745
      %v780 = vpack.c.b16 %v748, %v746
      %v781 = vpack.c.b16 %v751, %v749
      %v782 = vpack.c.b16 %v752, %v750
      %v783 = vpack.c.b16 %v755, %v753
      %v784 = vpack.c.b16 %v756, %v754
      %v785 = vpack.c.b16 %v759, %v757
      %v786 = vpack.c.b16 %v760, %v758
      %v787 = vpack.c.b16 %v763, %v761
      %v788 = vpack.c.b16 %v764, %v762
      %v789 = vpack.c.b16 %v767, %v765
      %v790 = vpack.c.b16 %v768, %v766
      %v791 = vpack.c.b16 %v771, %v769
      %v792 = vpack.c.b16 %v772, %v770
      %vm813 = vcmask 261120
      %v815 = vsel %vm813, %v708, 0
      %v818 = vsel %vm813, %v710, 0
      %820 = vmatpush.bf16.msra.mxu0 %v787
      %821 = vmatpush.bf16.msra.mxu0 %v785
      %822 = vmatpush.bf16.msra.mxu0 %v783
      %823 = vmatpush.bf16.msra.mxu0 %v781
      %824 = vmatpush.bf16.msra.mxu0 %v779
      %825 = vmatpush.bf16.msra.mxu0 %v777
      %826 = vmatpush.bf16.msra.mxu0 %v775
      %827 = vmatpush.bf16.msra.mxu0 %v773
      %828 = vmatmul.bf16.gmra.mxu0 %v707
      %v829 = vpop.f32.mrf.mxu0
      %v830 = vadd.f32 0.0, %v829
      %v831 = vpop.f32.mrf.mxu0
      %v832 = vadd.f32 0.0, %v831
      %833 = vmatmul.bf16.gmra.mxu0 %v709
      %v834 = vpop.f32.mrf.mxu0
      %v835 = vadd.f32 0.0, %v834
      %v836 = vpop.f32.mrf.mxu0
      %v837 = vadd.f32 0.0, %v836
      %838 = vdwg.mxu0
      %839 = vmatpush.bf16.msra.mxu0 0
      %840 = vmatpush.bf16.msra.mxu0 0
      %841 = vmatpush.bf16.msra.mxu0 0
      %842 = vmatpush.bf16.msra.mxu0 0
      %843 = vmatpush.bf16.msra.mxu0 0
      %844 = vmatpush.bf16.msra.mxu0 0
      %845 = vmatpush.bf16.msra.mxu0 %v791
      %846 = vmatpush.bf16.msra.mxu0 %v789
      %847 = vmatmul.bf16.gmra.mxu0 %v815
      %v848 = vpop.f32.mrf.mxu0
      %v849 = vadd.f32 %v830, %v848
      %v850 = vpop.f32.mrf.mxu0
      %v851 = vadd.f32 %v832, %v850
      %852 = vmatmul.bf16.gmra.mxu0 %v818
      %v853 = vpop.f32.mrf.mxu0
      %v854 = vadd.f32 %v835, %v853
      %v855 = vpop.f32.mrf.mxu0
      %v856 = vadd.f32 %v837, %v855
      %857 = vdwg.mxu0
      %858 = vmatpush.bf16.msra.mxu0 %v788
      %859 = vmatpush.bf16.msra.mxu0 %v786
      %860 = vmatpush.bf16.msra.mxu0 %v784
      %861 = vmatpush.bf16.msra.mxu0 %v782
      %862 = vmatpush.bf16.msra.mxu0 %v780
      %863 = vmatpush.bf16.msra.mxu0 %v778
      %864 = vmatpush.bf16.msra.mxu0 %v776
      %865 = vmatpush.bf16.msra.mxu0 %v774
      %866 = vmatmul.bf16.gmra.mxu0 %v707
      %v867 = vpop.f32.mrf.mxu0
      %v868 = vadd.f32 0.0, %v867
      %v869 = vpop.f32.mrf.mxu0
      %v870 = vadd.f32 0.0, %v869
      %871 = vmatmul.bf16.gmra.mxu0 %v709
      %v872 = vpop.f32.mrf.mxu0
      %v873 = vadd.f32 0.0, %v872
      %v874 = vpop.f32.mrf.mxu0
      %v875 = vadd.f32 0.0, %v874
      %876 = vdwg.mxu0
      %877 = vmatpush.bf16.msra.mxu0 0
      %878 = vmatpush.bf16.msra.mxu0 0
      %879 = vmatpush.bf16.msra.mxu0 0
      %880 = vmatpush.bf16.msra.mxu0 0
      %881 = vmatpush.bf16.msra.mxu0 0
      %882 = vmatpush.bf16.msra.mxu0 0
      %883 = vmatpush.bf16.msra.mxu0 %v792
      %884 = vmatpush.bf16.msra.mxu0 %v790
      %885 = vmatmul.bf16.gmra.mxu0 %v815
      %v886 = vpop.f32.mrf.mxu0
      %v887 = vadd.f32 %v868, %v886
      %v888 = vpop.f32.mrf.mxu0
      %v889 = vadd.f32 %v870, %v888
      %890 = vmatmul.bf16.gmra.mxu0 %v818
      %v891 = vpop.f32.mrf.mxu0
      %v892 = vadd.f32 %v873, %v891
      %v893 = vpop.f32.mrf.mxu0
      %v894 = vadd.f32 %v875, %v893
      %895 = vdwg.mxu0
      %v896 = vmax.f32 %v849, 0.0
      %v897 = vmax.f32 %v887, 0.0
      %v898 = vmax.f32 %v851, 0.0
      %v899 = vmax.f32 %v889, 0.0
      %v900 = vmax.f32 %v854, 0.0
      %v901 = vmax.f32 %v892, 0.0
      %v902 = vmax.f32 %v856, 0.0
      %v903 = vmax.f32 %v894, 0.0
      %904 = vst [vmem:[#allocation4 + $0x120] sm:$0xff] %v455
      %905 = vst [vmem:[#allocation4 + $0x128] sm:$0xff] %v456
      %906 = vrot.lane.b32.xlu0 %v896, 17
      %v907 = vpop.permute.xlu0 %906
      %908 = vrot.lane.b32.xlu0 %v898, 17
      %v909 = vpop.permute.xlu0 %908
      %910 = vrot.lane.b32.xlu0 %v900, 17
      %v911 = vpop.permute.xlu0 %910
      %912 = vrot.lane.b32.xlu0 %v902, 17
      %v913 = vpop.permute.xlu0 %912
      %914 = vrot.lane.b32.xlu0 %v897, 17
      %v915 = vpop.permute.xlu0 %914
      %916 = vrot.lane.b32.xlu0 %v899, 17
      %v917 = vpop.permute.xlu0 %916
      %918 = vrot.lane.b32.xlu0 %v901, 17
      %v919 = vpop.permute.xlu0 %918
      %920 = vrot.lane.b32.xlu0 %v903, 17
      %v921 = vpop.permute.xlu0 %920
      %v922 = vsel %vm238, %v907, %v915
      %v923 = vsel %vm238, %v909, %v917
      %v924 = vsel %vm238, %v911, %v919
      %v925 = vsel %vm238, %v913, %v921
      %v926 = vsel %vm238, %v915, %v907
      %v927 = vsel %vm238, %v917, %v909
      %v928 = vsel %vm238, %v919, %v911
      %v929 = vsel %vm238, %v921, %v913
      %v930 = vld [vmem:[%s4] ss:$8 sm:$0x3]
      %v932 = vperm.slane %v930, 0
      %v933 = vperm.slane %v930, 1
      %v936 = vmul.f32 %v926, %v932
      %v937 = vmul.f32 %v922, %v933
      %v938 = vmul.f32 %v927, %v932
      %v939 = vmul.f32 %v923, %v933
      %v940 = vmul.f32 %v928, %v932
      %v941 = vmul.f32 %v924, %v933
      %v942 = vmul.f32 %v929, %v932
      %v943 = vmul.f32 %v925, %v933
      %v944 = vpack.c.bf16 %v937, %v936
      %v945 = vpack.c.bf16 %v939, %v938
      %v946 = vpack.c.bf16 %v941, %v940
      %v947 = vpack.c.bf16 %v943, %v942
      %948 = vst [vmem:[#allocation4] sm:$0xff] %v944
      %949 = vst [vmem:[#allocation4 + $0x8] sm:$0xff] %v945
      %950 = vst [vmem:[#allocation4 + $0x10] sm:$0xff] %v946
      %951 = vst [vmem:[#allocation4 + $0x18] sm:$0xff] %v947
      %952 = vrot.lane.b32.xlu0 %v896, 16
      %v953 = vpop.permute.xlu0 %952
      %954 = vrot.lane.b32.xlu0 %v898, 16
      %v955 = vpop.permute.xlu0 %954
      %956 = vrot.lane.b32.xlu0 %v900, 16
      %v957 = vpop.permute.xlu0 %956
      %958 = vrot.lane.b32.xlu0 %v902, 16
      %v959 = vpop.permute.xlu0 %958
      %960 = vrot.lane.b32.xlu0 %v897, 16
      %v961 = vpop.permute.xlu0 %960
      %962 = vrot.lane.b32.xlu0 %v899, 16
      %v963 = vpop.permute.xlu0 %962
      %964 = vrot.lane.b32.xlu0 %v901, 16
      %v965 = vpop.permute.xlu0 %964
      %966 = vrot.lane.b32.xlu0 %v903, 16
      %v967 = vpop.permute.xlu0 %966
      %v968 = vsel %vm255, %v953, %v961
      %v969 = vsel %vm255, %v955, %v963
      %v970 = vsel %vm255, %v957, %v965
      %v971 = vsel %vm255, %v959, %v967
      %v972 = vsel %vm255, %v961, %v953
      %v973 = vsel %vm255, %v963, %v955
      %v974 = vsel %vm255, %v965, %v957
      %v975 = vsel %vm255, %v967, %v959
      %v976 = vld [vmem:[%s258] ss:$8 sm:$0x3]
      %v978 = vperm.slane %v976, 0
      %v979 = vperm.slane %v976, 1
      %v982 = vmul.f32 %v972, %v978
      %v983 = vmul.f32 %v968, %v979
      %v984 = vmul.f32 %v973, %v978
      %v985 = vmul.f32 %v969, %v979
      %v986 = vmul.f32 %v974, %v978
      %v987 = vmul.f32 %v970, %v979
      %v988 = vmul.f32 %v975, %v978
      %v989 = vmul.f32 %v971, %v979
      %v990 = vpack.c.bf16 %v983, %v982
      %v991 = vpack.c.bf16 %v985, %v984
      %v992 = vpack.c.bf16 %v987, %v986
      %v993 = vpack.c.bf16 %v989, %v988
      %994 = vst [vmem:[#allocation4 + $0x20] sm:$0xff] %v990
      %995 = vst [vmem:[#allocation4 + $0x28] sm:$0xff] %v991
      %996 = vst [vmem:[#allocation4 + $0x30] sm:$0xff] %v992
      %997 = vst [vmem:[#allocation4 + $0x38] sm:$0xff] %v993
      %998 = vrot.lane.b32.xlu0 %v896, 15
      %v999 = vpop.permute.xlu0 %998
      %1000 = vrot.lane.b32.xlu0 %v898, 15
      %v1001 = vpop.permute.xlu0 %1000
      %1002 = vrot.lane.b32.xlu0 %v900, 15
      %v1003 = vpop.permute.xlu0 %1002
      %1004 = vrot.lane.b32.xlu0 %v902, 15
      %v1005 = vpop.permute.xlu0 %1004
      %1006 = vrot.lane.b32.xlu0 %v897, 15
      %v1007 = vpop.permute.xlu0 %1006
      %1008 = vrot.lane.b32.xlu0 %v899, 15
      %v1009 = vpop.permute.xlu0 %1008
      %1010 = vrot.lane.b32.xlu0 %v901, 15
      %v1011 = vpop.permute.xlu0 %1010
      %1012 = vrot.lane.b32.xlu0 %v903, 15
      %v1013 = vpop.permute.xlu0 %1012
      %v1014 = vsel %vm273, %v999, %v1007
      %v1015 = vsel %vm273, %v1001, %v1009
      %v1016 = vsel %vm273, %v1003, %v1011
      %v1017 = vsel %vm273, %v1005, %v1013
      %v1018 = vsel %vm273, %v1007, %v999
      %v1019 = vsel %vm273, %v1009, %v1001
      %v1020 = vsel %vm273, %v1011, %v1003
      %v1021 = vsel %vm273, %v1013, %v1005
      %v1022 = vld [vmem:[%s276] ss:$8 sm:$0x3]
      %v1024 = vperm.slane %v1022, 0
      %v1025 = vperm.slane %v1022, 1
      %v1028 = vmul.f32 %v1018, %v1024
      %v1029 = vmul.f32 %v1014, %v1025
      %v1030 = vmul.f32 %v1019, %v1024
      %v1031 = vmul.f32 %v1015, %v1025
      %v1032 = vmul.f32 %v1020, %v1024
      %v1033 = vmul.f32 %v1016, %v1025
      %v1034 = vmul.f32 %v1021, %v1024
      %v1035 = vmul.f32 %v1017, %v1025
      %v1036 = vpack.c.bf16 %v1029, %v1028
      %v1037 = vpack.c.bf16 %v1031, %v1030
      %v1038 = vpack.c.bf16 %v1033, %v1032
      %v1039 = vpack.c.bf16 %v1035, %v1034
      %1040 = vst [vmem:[#allocation4 + $0x40] sm:$0xff] %v1036
      %1041 = vst [vmem:[#allocation4 + $0x48] sm:$0xff] %v1037
      %1042 = vst [vmem:[#allocation4 + $0x50] sm:$0xff] %v1038
      %1043 = vst [vmem:[#allocation4 + $0x58] sm:$0xff] %v1039
      %1044 = vrot.lane.b32.xlu0 %v896, 1
      %v1045 = vpop.permute.xlu0 %1044
      %1046 = vrot.lane.b32.xlu0 %v898, 1
      %v1047 = vpop.permute.xlu0 %1046
      %1048 = vrot.lane.b32.xlu0 %v900, 1
      %v1049 = vpop.permute.xlu0 %1048
      %1050 = vrot.lane.b32.xlu0 %v902, 1
      %v1051 = vpop.permute.xlu0 %1050
      %1052 = vrot.lane.b32.xlu0 %v897, 1
      %v1053 = vpop.permute.xlu0 %1052
      %1054 = vrot.lane.b32.xlu0 %v899, 1
      %v1055 = vpop.permute.xlu0 %1054
      %1056 = vrot.lane.b32.xlu0 %v901, 1
      %v1057 = vpop.permute.xlu0 %1056
      %1058 = vrot.lane.b32.xlu0 %v903, 1
      %v1059 = vpop.permute.xlu0 %1058
      %v1060 = vsel %vm291, %v1045, %v1053
      %v1061 = vsel %vm291, %v1047, %v1055
      %v1062 = vsel %vm291, %v1049, %v1057
      %v1063 = vsel %vm291, %v1051, %v1059
      %v1064 = vsel %vm291, %v1053, %v1045
      %v1065 = vsel %vm291, %v1055, %v1047
      %v1066 = vsel %vm291, %v1057, %v1049
      %v1067 = vsel %vm291, %v1059, %v1051
      %v1068 = vld [vmem:[%s294] ss:$8 sm:$0x3]
      %v1070 = vperm.slane %v1068, 0
      %v1071 = vperm.slane %v1068, 1
      %v1074 = vmul.f32 %v1064, %v1070
      %v1075 = vmul.f32 %v1060, %v1071
      %v1076 = vmul.f32 %v1065, %v1070
      %v1077 = vmul.f32 %v1061, %v1071
      %v1078 = vmul.f32 %v1066, %v1070
      %v1079 = vmul.f32 %v1062, %v1071
      %v1080 = vmul.f32 %v1067, %v1070
      %v1081 = vmul.f32 %v1063, %v1071
      %v1082 = vpack.c.bf16 %v1075, %v1074
      %v1083 = vpack.c.bf16 %v1077, %v1076
      %v1084 = vpack.c.bf16 %v1079, %v1078
      %v1085 = vpack.c.bf16 %v1081, %v1080
      %1086 = vst [vmem:[#allocation4 + $0x60] sm:$0xff] %v1082
      %1087 = vst [vmem:[#allocation4 + $0x68] sm:$0xff] %v1083
      %1088 = vst [vmem:[#allocation4 + $0x70] sm:$0xff] %v1084
      %1089 = vst [vmem:[#allocation4 + $0x78] sm:$0xff] %v1085
      %v1090 = vpack.c.bf16 %v897, %v896
      %v1091 = vpack.c.bf16 %v899, %v898
      %v1092 = vpack.c.bf16 %v901, %v900
      %v1093 = vpack.c.bf16 %v903, %v902
      %1094 = vst [vmem:[#allocation4 + $0x80] sm:$0xff] %v1090
      %1095 = vst [vmem:[#allocation4 + $0x88] sm:$0xff] %v1091
      %1096 = vst [vmem:[#allocation4 + $0x90] sm:$0xff] %v1092
      %1097 = vst [vmem:[#allocation4 + $0x98] sm:$0xff] %v1093
      %1098 = vrot.lane.b32.xlu0 %v896, 127
      %v1099 = vpop.permute.xlu0 %1098
      %1100 = vrot.lane.b32.xlu0 %v898, 127
      %v1101 = vpop.permute.xlu0 %1100
      %1102 = vrot.lane.b32.xlu0 %v900, 127
      %v1103 = vpop.permute.xlu0 %1102
      %1104 = vrot.lane.b32.xlu0 %v902, 127
      %v1105 = vpop.permute.xlu0 %1104
      %1106 = vrot.lane.b32.xlu0 %v897, 127
      %v1107 = vpop.permute.xlu0 %1106
      %1108 = vrot.lane.b32.xlu0 %v899, 127
      %v1109 = vpop.permute.xlu0 %1108
      %1110 = vrot.lane.b32.xlu0 %v901, 127
      %v1111 = vpop.permute.xlu0 %1110
      %1112 = vrot.lane.b32.xlu0 %v903, 127
      %v1113 = vpop.permute.xlu0 %1112
      %v1114 = vsel %vm311, %v1099, %v1107
      %v1115 = vsel %vm311, %v1101, %v1109
      %v1116 = vsel %vm311, %v1103, %v1111
      %v1117 = vsel %vm311, %v1105, %v1113
      %v1118 = vsel %vm311, %v1107, %v1099
      %v1119 = vsel %vm311, %v1109, %v1101
      %v1120 = vsel %vm311, %v1111, %v1103
      %v1121 = vsel %vm311, %v1113, %v1105
      %v1122 = vld [vmem:[%s314] ss:$8 sm:$0x3]
      %v1124 = vperm.slane %v1122, 0
      %v1125 = vperm.slane %v1122, 1
      %v1128 = vmul.f32 %v1114, %v1124
      %v1129 = vmul.f32 %v1118, %v1125
      %v1130 = vmul.f32 %v1115, %v1124
      %v1131 = vmul.f32 %v1119, %v1125
      %v1132 = vmul.f32 %v1116, %v1124
      %v1133 = vmul.f32 %v1120, %v1125
      %v1134 = vmul.f32 %v1117, %v1124
      %v1135 = vmul.f32 %v1121, %v1125
      %v1136 = vpack.c.bf16 %v1129, %v1128
      %v1137 = vpack.c.bf16 %v1131, %v1130
      %v1138 = vpack.c.bf16 %v1133, %v1132
      %v1139 = vpack.c.bf16 %v1135, %v1134
      %1140 = vst [vmem:[#allocation4 + $0xa0] sm:$0xff] %v1136
      %1141 = vst [vmem:[#allocation4 + $0xa8] sm:$0xff] %v1137
      %1142 = vst [vmem:[#allocation4 + $0xb0] sm:$0xff] %v1138
      %1143 = vst [vmem:[#allocation4 + $0xb8] sm:$0xff] %v1139
      %1144 = vrot.lane.b32.xlu0 %v896, 113
      %v1145 = vpop.permute.xlu0 %1144
      %1146 = vrot.lane.b32.xlu0 %v898, 113
      %v1147 = vpop.permute.xlu0 %1146
      %1148 = vrot.lane.b32.xlu0 %v900, 113
      %v1149 = vpop.permute.xlu0 %1148
      %1150 = vrot.lane.b32.xlu0 %v902, 113
      %v1151 = vpop.permute.xlu0 %1150
      %1152 = vrot.lane.b32.xlu0 %v897, 113
      %v1153 = vpop.permute.xlu0 %1152
      %1154 = vrot.lane.b32.xlu0 %v899, 113
      %v1155 = vpop.permute.xlu0 %1154
      %1156 = vrot.lane.b32.xlu0 %v901, 113
      %v1157 = vpop.permute.xlu0 %1156
      %1158 = vrot.lane.b32.xlu0 %v903, 113
      %v1159 = vpop.permute.xlu0 %1158
      %v1160 = vsel %vm329, %v1145, %v1153
      %v1161 = vsel %vm329, %v1147, %v1155
      %v1162 = vsel %vm329, %v1149, %v1157
      %v1163 = vsel %vm329, %v1151, %v1159
      %v1164 = vsel %vm329, %v1153, %v1145
      %v1165 = vsel %vm329, %v1155, %v1147
      %v1166 = vsel %vm329, %v1157, %v1149
      %v1167 = vsel %vm329, %v1159, %v1151
      %v1168 = vld [vmem:[%s332] ss:$8 sm:$0x3]
      %v1170 = vperm.slane %v1168, 0
      %v1171 = vperm.slane %v1168, 1
      %v1174 = vmul.f32 %v1160, %v1170
      %v1175 = vmul.f32 %v1164, %v1171
      %v1176 = vmul.f32 %v1161, %v1170
      %v1177 = vmul.f32 %v1165, %v1171
      %v1178 = vmul.f32 %v1162, %v1170
      %v1179 = vmul.f32 %v1166, %v1171
      %v1180 = vmul.f32 %v1163, %v1170
      %v1181 = vmul.f32 %v1167, %v1171
      %v1182 = vpack.c.bf16 %v1175, %v1174
      %v1183 = vpack.c.bf16 %v1177, %v1176
      %v1184 = vpack.c.bf16 %v1179, %v1178
      %v1185 = vpack.c.bf16 %v1181, %v1180
      %1186 = vst [vmem:[#allocation4 + $0xc0] sm:$0xff] %v1182
      %1187 = vst [vmem:[#allocation4 + $0xc8] sm:$0xff] %v1183
      %1188 = vst [vmem:[#allocation4 + $0xd0] sm:$0xff] %v1184
      %1189 = vst [vmem:[#allocation4 + $0xd8] sm:$0xff] %v1185
      %1190 = vrot.lane.b32.xlu0 %v896, 112
      %v1191 = vpop.permute.xlu0 %1190
      %1192 = vrot.lane.b32.xlu0 %v898, 112
      %v1193 = vpop.permute.xlu0 %1192
      %1194 = vrot.lane.b32.xlu0 %v900, 112
      %v1195 = vpop.permute.xlu0 %1194
      %1196 = vrot.lane.b32.xlu0 %v902, 112
      %v1197 = vpop.permute.xlu0 %1196
      %1198 = vrot.lane.b32.xlu0 %v897, 112
      %v1199 = vpop.permute.xlu0 %1198
      %1200 = vrot.lane.b32.xlu0 %v899, 112
      %v1201 = vpop.permute.xlu0 %1200
      %1202 = vrot.lane.b32.xlu0 %v901, 112
      %v1203 = vpop.permute.xlu0 %1202
      %1204 = vrot.lane.b32.xlu0 %v903, 112
      %v1205 = vpop.permute.xlu0 %1204
      %v1206 = vsel %vm347, %v1191, %v1199
      %v1207 = vsel %vm347, %v1193, %v1201
      %v1208 = vsel %vm347, %v1195, %v1203
      %v1209 = vsel %vm347, %v1197, %v1205
      %v1210 = vsel %vm347, %v1199, %v1191
      %v1211 = vsel %vm347, %v1201, %v1193
      %v1212 = vsel %vm347, %v1203, %v1195
      %v1213 = vsel %vm347, %v1205, %v1197
      %v1214 = vld [vmem:[%s350] ss:$8 sm:$0x3]
      %v1216 = vperm.slane %v1214, 0
      %v1217 = vperm.slane %v1214, 1
      %v1220 = vmul.f32 %v1206, %v1216
      %v1221 = vmul.f32 %v1210, %v1217
      %v1222 = vmul.f32 %v1207, %v1216
      %v1223 = vmul.f32 %v1211, %v1217
      %v1224 = vmul.f32 %v1208, %v1216
      %v1225 = vmul.f32 %v1212, %v1217
      %v1226 = vmul.f32 %v1209, %v1216
      %v1227 = vmul.f32 %v1213, %v1217
      %v1228 = vpack.c.bf16 %v1221, %v1220
      %v1229 = vpack.c.bf16 %v1223, %v1222
      %v1230 = vpack.c.bf16 %v1225, %v1224
      %v1231 = vpack.c.bf16 %v1227, %v1226
      %1232 = vst [vmem:[#allocation4 + $0xe0] sm:$0xff] %v1228
      %1233 = vst [vmem:[#allocation4 + $0xe8] sm:$0xff] %v1229
      %1234 = vst [vmem:[#allocation4 + $0xf0] sm:$0xff] %v1230
      %1235 = vst [vmem:[#allocation4 + $0xf8] sm:$0xff] %v1231
      %1236 = vrot.lane.b32.xlu0 %v896, 111
      %v1237 = vpop.permute.xlu0 %1236
      %1238 = vrot.lane.b32.xlu0 %v898, 111
      %v1239 = vpop.permute.xlu0 %1238
      %1240 = vrot.lane.b32.xlu0 %v900, 111
      %v1241 = vpop.permute.xlu0 %1240
      %1242 = vrot.lane.b32.xlu0 %v902, 111
      %v1243 = vpop.permute.xlu0 %1242
      %1244 = vrot.lane.b32.xlu0 %v897, 111
      %v1245 = vpop.permute.xlu0 %1244
      %1246 = vrot.lane.b32.xlu0 %v899, 111
      %v1247 = vpop.permute.xlu0 %1246
      %1248 = vrot.lane.b32.xlu0 %v901, 111
      %v1249 = vpop.permute.xlu0 %1248
      %1250 = vrot.lane.b32.xlu0 %v903, 111
      %v1251 = vpop.permute.xlu0 %1250
      %v1252 = vsel %vm365, %v1237, %v1245
      %v1253 = vsel %vm365, %v1239, %v1247
      %v1254 = vsel %vm365, %v1241, %v1249
      %v1255 = vsel %vm365, %v1243, %v1251
      %v1256 = vsel %vm365, %v1245, %v1237
      %v1257 = vsel %vm365, %v1247, %v1239
      %v1258 = vsel %vm365, %v1249, %v1241
      %v1259 = vsel %vm365, %v1251, %v1243
      %v1260 = vld [vmem:[%s368] ss:$8 sm:$0x3]
      %v1262 = vperm.slane %v1260, 0
      %v1263 = vperm.slane %v1260, 1
      %v1266 = vmul.f32 %v1252, %v1262
      %v1267 = vmul.f32 %v1256, %v1263
      %v1268 = vmul.f32 %v1253, %v1262
      %v1269 = vmul.f32 %v1257, %v1263
      %v1270 = vmul.f32 %v1254, %v1262
      %v1271 = vmul.f32 %v1258, %v1263
      %v1272 = vmul.f32 %v1255, %v1262
      %v1273 = vmul.f32 %v1259, %v1263
      %v1274 = vpack.c.bf16 %v1267, %v1266
      %v1275 = vpack.c.bf16 %v1269, %v1268
      %v1276 = vpack.c.bf16 %v1271, %v1270
      %v1277 = vpack.c.bf16 %v1273, %v1272
      %1278 = vst [vmem:[#allocation4 + $0x100] sm:$0xff] %v1274
      %1279 = vst [vmem:[#allocation4 + $0x108] sm:$0xff] %v1275
      %1280 = vst [vmem:[#allocation4 + $0x110] sm:$0xff] %v1276
      %1281 = vst [vmem:[#allocation4 + $0x118] sm:$0xff] %v1277
      %v1282 = vld [vmem:[%s3] sm:$0xff]
      %v1283 = vld [vmem:[%s3 + $0x8] sm:$0xf]
      %v1284 = vld [vmem:[#allocation4] sm:$0xff]
      %v1285 = vld [vmem:[#allocation4 + $0x8] sm:$0xff]
      %v1286 = vld [vmem:[#allocation4 + $0x10] sm:$0xff]
      %v1287 = vld [vmem:[#allocation4 + $0x18] sm:$0xff]
      %v1288 = vld [vmem:[#allocation4 + $0x20] sm:$0xff]
      %v1289 = vld [vmem:[#allocation4 + $0x28] sm:$0xff]
      %v1290 = vld [vmem:[#allocation4 + $0x30] sm:$0xff]
      %v1291 = vld [vmem:[#allocation4 + $0x38] sm:$0xff]
      %v1292 = vld [vmem:[#allocation4 + $0x40] sm:$0xff]
      %v1293 = vld [vmem:[#allocation4 + $0x48] sm:$0xff]
      %v1294 = vld [vmem:[#allocation4 + $0x50] sm:$0xff]
      %v1295 = vld [vmem:[#allocation4 + $0x58] sm:$0xff]
      %v1296 = vld [vmem:[#allocation4 + $0x60] sm:$0xff]
      %v1297 = vld [vmem:[#allocation4 + $0x68] sm:$0xff]
      %v1298 = vld [vmem:[#allocation4 + $0x70] sm:$0xff]
      %v1299 = vld [vmem:[#allocation4 + $0x78] sm:$0xff]
      %v1300 = vld [vmem:[#allocation4 + $0x80] sm:$0xff]
      %v1301 = vld [vmem:[#allocation4 + $0x88] sm:$0xff]
      %v1302 = vld [vmem:[#allocation4 + $0x90] sm:$0xff]
      %v1303 = vld [vmem:[#allocation4 + $0x98] sm:$0xff]
      %v1304 = vld [vmem:[#allocation4 + $0xa0] sm:$0xff]
      %v1305 = vld [vmem:[#allocation4 + $0xa8] sm:$0xff]
      %v1306 = vld [vmem:[#allocation4 + $0xb0] sm:$0xff]
      %v1307 = vld [vmem:[#allocation4 + $0xb8] sm:$0xff]
      %v1308 = vld [vmem:[#allocation4 + $0xc0] sm:$0xff]
      %v1309 = vld [vmem:[#allocation4 + $0xc8] sm:$0xff]
      %v1310 = vld [vmem:[#allocation4 + $0xd0] sm:$0xff]
      %v1311 = vld [vmem:[#allocation4 + $0xd8] sm:$0xff]
      %v1312 = vld [vmem:[#allocation4 + $0xe0] sm:$0xff]
      %v1313 = vld [vmem:[#allocation4 + $0xe8] sm:$0xff]
      %v1314 = vld [vmem:[#allocation4 + $0xf0] sm:$0xff]
      %v1315 = vld [vmem:[#allocation4 + $0xf8] sm:$0xff]
      %v1316 = vld [vmem:[#allocation4 + $0x100] sm:$0xff]
      %v1317 = vld [vmem:[#allocation4 + $0x108] sm:$0xff]
      %v1318 = vld [vmem:[#allocation4 + $0x110] sm:$0xff]
      %v1319 = vld [vmem:[#allocation4 + $0x118] sm:$0xff]
      %v1320 = vld [vmem:[#allocation4 + $0x120] sm:$0xff]
      %v1321 = vld [vmem:[#allocation4 + $0x128] sm:$0xff]
      %v1324 = vunpack.c.l.b16 %v1282
      %v1325 = vunpack.c.h.b16 %v1282
      %v1326 = vunpack.c.l.b16 %v1283
      %v1327 = vpack.c.b16 %v1324, %v1324
      %v1328 = vpack.c.b16 %v1325, %v1325
      %v1329 = vpack.c.b16 %v1326, %v1326
      %v1370 = vunpack.c.l.b16 %v1284
      %v1371 = vunpack.c.h.b16 %v1284
      %v1372 = vunpack.c.l.b16 %v1285
      %v1373 = vunpack.c.h.b16 %v1285
      %v1374 = vunpack.c.l.b16 %v1286
      %v1375 = vunpack.c.h.b16 %v1286
      %v1376 = vunpack.c.l.b16 %v1287
      %v1377 = vunpack.c.h.b16 %v1287
      %v1378 = vunpack.c.l.b16 %v1288
      %v1379 = vunpack.c.h.b16 %v1288
      %v1380 = vunpack.c.l.b16 %v1289
      %v1381 = vunpack.c.h.b16 %v1289
      %v1382 = vunpack.c.l.b16 %v1290
      %v1383 = vunpack.c.h.b16 %v1290
      %v1384 = vunpack.c.l.b16 %v1291
      %v1385 = vunpack.c.h.b16 %v1291
      %v1386 = vunpack.c.l.b16 %v1292
      %v1387 = vunpack.c.h.b16 %v1292
      %v1388 = vunpack.c.l.b16 %v1293
      %v1389 = vunpack.c.h.b16 %v1293
      %v1390 = vunpack.c.l.b16 %v1294
      %v1391 = vunpack.c.h.b16 %v1294
      %v1392 = vunpack.c.l.b16 %v1295
      %v1393 = vunpack.c.h.b16 %v1295
      %v1394 = vunpack.c.l.b16 %v1296
      %v1395 = vunpack.c.h.b16 %v1296
      %v1396 = vunpack.c.l.b16 %v1297
      %v1397 = vunpack.c.h.b16 %v1297
      %v1398 = vunpack.c.l.b16 %v1298
      %v1399 = vunpack.c.h.b16 %v1298
      %v1400 = vunpack.c.l.b16 %v1299
      %v1401 = vunpack.c.h.b16 %v1299
      %v1402 = vunpack.c.l.b16 %v1300
      %v1403 = vunpack.c.h.b16 %v1300
      %v1404 = vunpack.c.l.b16 %v1301
      %v1405 = vunpack.c.h.b16 %v1301
      %v1406 = vunpack.c.l.b16 %v1302
      %v1407 = vunpack.c.h.b16 %v1302
      %v1408 = vunpack.c.l.b16 %v1303
      %v1409 = vunpack.c.h.b16 %v1303
      %v1410 = vunpack.c.l.b16 %v1304
      %v1411 = vunpack.c.h.b16 %v1304
      %v1412 = vunpack.c.l.b16 %v1305
      %v1413 = vunpack.c.h.b16 %v1305
      %v1414 = vunpack.c.l.b16 %v1306
      %v1415 = vunpack.c.h.b16 %v1306
      %v1416 = vunpack.c.l.b16 %v1307
      %v1417 = vunpack.c.h.b16 %v1307
      %v1418 = vunpack.c.l.b16 %v1308
      %v1419 = vunpack.c.h.b16 %v1308
      %v1420 = vunpack.c.l.b16 %v1309
      %v1421 = vunpack.c.h.b16 %v1309
      %v1422 = vunpack.c.l.b16 %v1310
      %v1423 = vunpack.c.h.b16 %v1310
      %v1424 = vunpack.c.l.b16 %v1311
      %v1425 = vunpack.c.h.b16 %v1311
      %v1426 = vunpack.c.l.b16 %v1312
      %v1427 = vunpack.c.h.b16 %v1312
      %v1428 = vunpack.c.l.b16 %v1313
      %v1429 = vunpack.c.h.b16 %v1313
      %v1430 = vunpack.c.l.b16 %v1314
      %v1431 = vunpack.c.h.b16 %v1314
      %v1432 = vunpack.c.l.b16 %v1315
      %v1433 = vunpack.c.h.b16 %v1315
      %v1434 = vunpack.c.l.b16 %v1316
      %v1435 = vunpack.c.h.b16 %v1316
      %v1436 = vunpack.c.l.b16 %v1317
      %v1437 = vunpack.c.h.b16 %v1317
      %v1438 = vunpack.c.l.b16 %v1318
      %v1439 = vunpack.c.h.b16 %v1318
      %v1440 = vunpack.c.l.b16 %v1319
      %v1441 = vunpack.c.h.b16 %v1319
      %v1442 = vunpack.c.l.b16 %v1320
      %v1443 = vunpack.c.h.b16 %v1320
      %v1444 = vunpack.c.l.b16 %v1321
      %v1445 = vunpack.c.h.b16 %v1321
      %v1446 = vpack.c.b16 %v1372, %v1370
      %v1447 = vpack.c.b16 %v1373, %v1371
      %v1448 = vpack.c.b16 %v1376, %v1374
      %v1449 = vpack.c.b16 %v1377, %v1375
      %v1450 = vpack.c.b16 %v1380, %v1378
      %v1451 = vpack.c.b16 %v1381, %v1379
      %v1452 = vpack.c.b16 %v1384, %v1382
      %v1453 = vpack.c.b16 %v1385, %v1383
      %v1454 = vpack.c.b16 %v1388, %v1386
      %v1455 = vpack.c.b16 %v1389, %v1387
      %v1456 = vpack.c.b16 %v1392, %v1390
      %v1457 = vpack.c.b16 %v1393, %v1391
      %v1458 = vpack.c.b16 %v1396, %v1394
      %v1459 = vpack.c.b16 %v1397, %v1395
      %v1460 = vpack.c.b16 %v1400, %v1398
      %v1461 = vpack.c.b16 %v1401, %v1399
      %v1462 = vpack.c.b16 %v1404, %v1402
      %v1463 = vpack.c.b16 %v1405, %v1403
      %v1464 = vpack.c.b16 %v1408, %v1406
      %v1465 = vpack.c.b16 %v1409, %v1407
      %v1466 = vpack.c.b16 %v1412, %v1410
      %v1467 = vpack.c.b16 %v1413, %v1411
      %v1468 = vpack.c.b16 %v1416, %v1414
      %v1469 = vpack.c.b16 %v1417, %v1415
      %v1470 = vpack.c.b16 %v1420, %v1418
      %v1471 = vpack.c.b16 %v1421, %v1419
      %v1472 = vpack.c.b16 %v1424, %v1422
      %v1473 = vpack.c.b16 %v1425, %v1423
      %v1474 = vpack.c.b16 %v1428, %v1426
      %v1475 = vpack.c.b16 %v1429, %v1427
      %v1476 = vpack.c.b16 %v1432, %v1430
      %v1477 = vpack.c.b16 %v1433, %v1431
      %v1478 = vpack.c.b16 %v1436, %v1434
      %v1479 = vpack.c.b16 %v1437, %v1435
      %v1480 = vpack.c.b16 %v1440, %v1438
      %v1481 = vpack.c.b16 %v1441, %v1439
      %v1482 = vpack.c.b16 %v1444, %v1442
      %v1483 = vpack.c.b16 %v1445, %v1443
      %vm1522 = vcmask 392192
      %v1524 = vsel %vm1522, %v1329, 0
      %1526 = vmatpush.bf16.msra.mxu0 %v1460
      %1527 = vmatpush.bf16.msra.mxu0 %v1458
      %1528 = vmatpush.bf16.msra.mxu0 %v1456
      %1529 = vmatpush.bf16.msra.mxu0 %v1454
      %1530 = vmatpush.bf16.msra.mxu0 %v1452
      %1531 = vmatpush.bf16.msra.mxu0 %v1450
      %1532 = vmatpush.bf16.msra.mxu0 %v1448
      %1533 = vmatpush.bf16.msra.mxu0 %v1446
      %1534 = vmatmul.bf16.gmra.mxu0 %v1327
      %v1535 = vpop.f32.mrf.mxu0
      %v1536 = vadd.f32 0.0, %v1535
      %v1537 = vpop.f32.mrf.mxu0
      %1538 = vdwg.mxu0
      %1539 = vmatpush.bf16.msra.mxu0 %v1476
      %1540 = vmatpush.bf16.msra.mxu0 %v1474
      %1541 = vmatpush.bf16.msra.mxu0 %v1472
      %1542 = vmatpush.bf16.msra.mxu0 %v1470
      %1543 = vmatpush.bf16.msra.mxu0 %v1468
      %1544 = vmatpush.bf16.msra.mxu0 %v1466
      %1545 = vmatpush.bf16.msra.mxu0 %v1464
      %1546 = vmatpush.bf16.msra.mxu0 %v1462
      %1547 = vmatmul.bf16.gmra.mxu0 %v1328
      %v1548 = vpop.f32.mrf.mxu0
      %v1549 = vadd.f32 %v1536, %v1548
      %v1550 = vpop.f32.mrf.mxu0
      %1551 = vdwg.mxu0
      %1552 = vmatpush.bf16.msra.mxu0 0
      %1553 = vmatpush.bf16.msra.mxu0 0
      %1554 = vmatpush.bf16.msra.mxu0 0
      %1555 = vmatpush.bf16.msra.mxu0 0
      %1556 = vmatpush.bf16.msra.mxu0 0
      %1557 = vmatpush.bf16.msra.mxu0 %v1482
      %1558 = vmatpush.bf16.msra.mxu0 %v1480
      %1559 = vmatpush.bf16.msra.mxu0 %v1478
      %1560 = vmatmul.bf16.gmra.mxu0 %v1524
      %v1561 = vpop.f32.mrf.mxu0
      %v1562 = vadd.f32 %v1549, %v1561
      %v1563 = vpop.f32.mrf.mxu0
      %1564 = vdwg.mxu0
      %1565 = vmatpush.bf16.msra.mxu0 %v1461
      %1566 = vmatpush.bf16.msra.mxu0 %v1459
      %1567 = vmatpush.bf16.msra.mxu0 %v1457
      %1568 = vmatpush.bf16.msra.mxu0 %v1455
      %1569 = vmatpush.bf16.msra.mxu0 %v1453
      %1570 = vmatpush.bf16.msra.mxu0 %v1451
      %1571 = vmatpush.bf16.msra.mxu0 %v1449
      %1572 = vmatpush.bf16.msra.mxu0 %v1447
      %1573 = vmatmul.bf16.gmra.mxu0 %v1327
      %v1574 = vpop.f32.mrf.mxu0
      %v1575 = vadd.f32 0.0, %v1574
      %v1576 = vpop.f32.mrf.mxu0
      %1577 = vdwg.mxu0
      %1578 = vmatpush.bf16.msra.mxu0 %v1477
      %1579 = vmatpush.bf16.msra.mxu0 %v1475
      %1580 = vmatpush.bf16.msra.mxu0 %v1473
      %1581 = vmatpush.bf16.msra.mxu0 %v1471
      %1582 = vmatpush.bf16.msra.mxu0 %v1469
      %1583 = vmatpush.bf16.msra.mxu0 %v1467
      %1584 = vmatpush.bf16.msra.mxu0 %v1465
      %1585 = vmatpush.bf16.msra.mxu0 %v1463
      %1586 = vmatmul.bf16.gmra.mxu0 %v1328
      %v1587 = vpop.f32.mrf.mxu0
      %v1588 = vadd.f32 %v1575, %v1587
      %v1589 = vpop.f32.mrf.mxu0
      %1590 = vdwg.mxu0
      %1591 = vmatpush.bf16.msra.mxu0 0
      %1592 = vmatpush.bf16.msra.mxu0 0
      %1593 = vmatpush.bf16.msra.mxu0 0
      %1594 = vmatpush.bf16.msra.mxu0 0
      %1595 = vmatpush.bf16.msra.mxu0 0
      %1596 = vmatpush.bf16.msra.mxu0 %v1483
      %1597 = vmatpush.bf16.msra.mxu0 %v1481
      %1598 = vmatpush.bf16.msra.mxu0 %v1479
      %1599 = vmatmul.bf16.gmra.mxu0 %v1524
      %v1600 = vpop.f32.mrf.mxu0
      %v1601 = vadd.f32 %v1588, %v1600
      %v1602 = vpop.f32.mrf.mxu0
      %1603 = vdwg.mxu0
      %v1606 = vrot.slane %v1601, 7
      %vm1607 = vcmask 1040384
      %v1608 = vsel %vm1607, %v1562, %v1606
      %v1610 = vlaneseq
      %vm1611 = vcmp.ge.s32.totalorder %v1610, 0
      %vm1612 = vcmp.lt.s32.totalorder %v1610, 256
      %vm1613 = vmand %vm1611, %vm1612
      %1614 = vst.msk [vmem:[%s222] sm:$0x3] %vm1613, %v1608
      %p1615 = scmp.lt.s32.totalorder %s16, 1
      %s1616 = scalar_select %p1615, %s16, 1
      %s1617 = smul.addr %s1616, 2
      %s1618 = scalar_lea.vmem %s5, %s1617
      // Predicated region
      $region41: #{_edge_net_pallas.1} parent=39 // pred_check
        %p1619 = pneg %p144
      $region42: #{_edge_net_pallas.1} parent=39 // pred_check_branch
        %1621 = sbr.rel (%p1619) target = $region44
      $region43: #{_edge_net_pallas.1} parent=39 // pred_region
        _
      $region44: #{_edge_net_pallas.1} parent=39 // pred_fallthru
        _
    $region40: #{_edge_net_pallas.1} parent=5 // pred_fallthru
      _
    %p1622 = scmp.le.s32.totalorder 2, %s11
    // Predicated region
    $region45: #{_edge_net_pallas.1} parent=5 // pred_check
      %p1623 = pneg %p1622
    $region46: #{_edge_net_pallas.1} parent=5 // pred_check_branch
      %1625 = sbr.rel (%p1623) target = $region48
    $region47: #{_edge_net_pallas.1} parent=5 // pred_region
      %s1626 = ssub.s32 %s11, 2
      // Predicated region
      $region49: #{_edge_net_pallas.1} parent=47 // pred_check
        %p1627 = pneg %p150
      $region50: #{_edge_net_pallas.1} parent=47 // pred_check_branch
        %1629 = sbr.rel (%p1627) target = $region52
      $region51: #{_edge_net_pallas.1} parent=47 // pred_region
        %p1630 = scmp.lt.s32.totalorder %s17, 1
        %s1631 = scalar_select %p1630, %s17, 1
        %s1632 = smul.addr %s1631, 2
        %s1633 = scalar_lea.vmem %s5, %s1632
      $region52: #{_edge_net_pallas.1} parent=47 // pred_fallthru
        _
    $region48: #{_edge_net_pallas.1} parent=5 // pred_fallthru
      _
  $region6: #{_edge_net_pallas.1} parent=0 // loop_footer
    %s15 = sadd.s32 1, %s11
  $region7: #{_edge_net_pallas.1} parent=0 // loop_footer_branch
    %10 = sbr.rel target = $region3
  $region8: #{_edge_net_pallas.1} parent=0 // loop_exit
    _

</llo_original>
